<compile_context>
chip_gen: v7x
topology: tpu7x:2x2x1
jax: 0.10.0
libtpu: 0.0.40
codegen_flags: <defaults>
</compile_context>

<pallas_src>
import math

import jax
import jax.numpy as jnp
from jax.experimental import pallas as pl
from jax.experimental.pallas import tpu as pltpu


def _round_up(a: int, b: int) -> int:
    return ((a + b - 1) // b) * b


def _vmem_capacity_bytes() -> int:
    # Conservative fallback = v7x per-TC VMEM if the query is unavailable.
    try:
        return int(pltpu.get_tpu_info().vmem_capacity_bytes)
    except Exception:
        return 64 << 20


def _ffn_kernel_inplace(x_ref, w1_ref, b1_ref, w2_ref, b2_ref, o_ref):
    """f32 output: accumulate matmul-2 partial sums directly in the resident out block."""
    h_step = pl.program_id(1)

    @pl.when(h_step == 0)
    def _init():
        o_ref[...] = jnp.zeros_like(o_ref)

    # Matmul 1 on the MXU, f32 accumulation regardless of input dtype.
    h = jnp.dot(x_ref[...], w1_ref[...], preferred_element_type=jnp.float32)
    # Bias + ReLU epilogue in b1's dtype (f32 by default; bf16 on v6e/v7x if requested),
    # then downcast to the matmul-2 input dtype.
    h = jnp.maximum(h.astype(b1_ref.dtype) + b1_ref[...], 0).astype(w2_ref.dtype)
    o_ref[...] += jnp.dot(h, w2_ref[...], preferred_element_type=jnp.float32)

    @pl.when(h_step == pl.num_programs(1) - 1)
    def _finalize():
        o_ref[...] += b2_ref[...]


def _ffn_kernel_scratch(x_ref, w1_ref, b1_ref, w2_ref, b2_ref, o_ref, acc_ref):
    """Narrow output dtype: accumulate in an f32 VMEM scratch, cast on writeback."""
    h_step = pl.program_id(1)

    @pl.when(h_step == 0)
    def _init():
        acc_ref[...] = jnp.zeros_like(acc_ref)

    h = jnp.dot(x_ref[...], w1_ref[...], preferred_element_type=jnp.float32)
    h = jnp.maximum(h.astype(b1_ref.dtype) + b1_ref[...], 0).astype(w2_ref.dtype)
    acc_ref[...] += jnp.dot(h, w2_ref[...], preferred_element_type=jnp.float32)

    @pl.when(h_step == pl.num_programs(1) - 1)
    def _finalize():
        o_ref[...] = (acc_ref[...] + b2_ref[...]).astype(o_ref.dtype)


def feedforward(x, w1, b1, w2, b2, *, tm=None, th=None, compute_dtype=None,
                epilogue_dtype=None, vmem_limit_bytes=None):
    """x: (B, T, D) -> (B, T, D). Matches nn.Linear(D,H) -> ReLU -> nn.Linear(H,D).

    w1/w2 are (in, out), i.e. torch nn.Linear.weight transposed.
    The compute dtype follows the weight dtype (pre-cast weights to bf16 once
    outside any jit'd step for best perf); accumulation is always f32 and the
    output keeps x.dtype.
    """
    B, T, D = x.shape
    D_in, H = w1.shape
    assert D_in == D and w2.shape == (H, D) and b1.shape == (H,) and b2.shape == (D,)

    out_dtype = jnp.dtype(x.dtype)
    cdt = jnp.dtype(w1.dtype) if compute_dtype is None else jnp.dtype(compute_dtype)
    edt = jnp.dtype(jnp.float32) if epilogue_dtype is None else jnp.dtype(epilogue_dtype)
    itemsize = cdt.itemsize
    out_itemsize = out_dtype.itemsize
    sublane = max(8, 32 // itemsize)          # packed-sublane multiple of compute dtype

    # ---------------- hidden-dim tiling (MXU is 256-deep on v6e/v7x) -------------
    th_eff = min(H if th is None else th, H)
    if th_eff >= 256:
        th_eff = (th_eff // 256) * 256
    elif th_eff >= 128:
        th_eff = 128
    else:
        th_eff = H                             # tiny H: single full-dim block
    H_pad = _round_up(H, th_eff)

    # ---------------- token tiling -----------------------------------------------
    M = B * T
    tm_eff = 512 if tm is None else tm
    # Keep >= 2 token tiles so the "parallel" M axis gives both TensorCores work.
    tm_eff = min(tm_eff, max(sublane, _round_up(-(-M // 2), sublane)))
    tm_eff = max(sublane, _round_up(tm_eff, sublane))

    use_scratch = out_dtype != jnp.dtype(jnp.float32)

    def footprint(tm_, th_):
        return (2 * tm_ * D * itemsize                       # x tile (double buffered)
                + 2 * D * th_ * itemsize                     # W1 tile
                + 2 * th_ * D * itemsize                     # W2 tile
                + 2 * th_ * edt.itemsize + 2 * D * 4         # biases
                + 2 * tm_ * D * out_itemsize                 # out tile
                + (tm_ * D * 4 if use_scratch else 0)        # f32 accumulator scratch
                + tm_ * th_ * (4 + itemsize))                # (tm, th) intermediate + downcast

    capacity = _vmem_capacity_bytes()
    budget = int(0.75 * capacity)
    while footprint(tm_eff, th_eff) > budget and tm_eff > sublane:
        tm_eff = max(sublane, _round_up(tm_eff // 2, sublane))
    while footprint(tm_eff, th_eff) > budget and th_eff > 128 and (th_eff // 2) % 128 == 0:
        th_eff //= 2
        H_pad = _round_up(H, th_eff)

    M_pad = _round_up(M, tm_eff)
    grid_m = M_pad // tm_eff
    grid_h = H_pad // th_eff

    # ---------------- operand preparation ----------------------------------------
    x2d = x.reshape(M, D)
    if x2d.dtype != cdt:
        x2d = x2d.astype(cdt)
    if M_pad != M:
        x2d = jnp.pad(x2d, ((0, M_pad - M), (0, 0)))
    # No-op if weights were pre-cast to the compute dtype outside the step fn.
    w1c = w1 if w1.dtype == cdt else w1.astype(cdt)
    w2c = w2 if w2.dtype == cdt else w2.astype(cdt)
    b1r = b1.reshape(1, H).astype(edt)
    b2r = b2.reshape(1, D).astype(jnp.float32)
    if H_pad != H:
        # Zero-padded hidden units contribute exactly 0 after ReLU @ zero rows.
        w1c = jnp.pad(w1c, ((0, 0), (0, H_pad - H)))
        b1r = jnp.pad(b1r, ((0, 0), (0, H_pad - H)))
        w2c = jnp.pad(w2c, ((0, H_pad - H), (0, 0)))

    cost = pl.CostEstimate(
        flops=4 * M_pad * D * H_pad,
        transcendentals=0,
        bytes_accessed=(M_pad * D * itemsize                      # x (once)
                        + grid_m * 2 * D * H_pad * itemsize       # W1+W2 restreamed per M tile
                        + H_pad * edt.itemsize + D * 4            # biases
                        + M_pad * D * out_itemsize),              # out
    )

    if vmem_limit_bytes is None:
        need = footprint(tm_eff, th_eff)
        vmem_limit_bytes = min(int(need * 5 // 4) + (2 << 20), int(0.85 * capacity))
        vmem_limit_bytes = max(vmem_limit_bytes, 16 << 20)
    vmem_limit_bytes = min(vmem_limit_bytes, int(0.85 * capacity))

    kernel = _ffn_kernel_scratch if use_scratch else _ffn_kernel_inplace
    scratch = [pltpu.VMEM((tm_eff, D), jnp.float32)] if use_scratch else []

    # TODO(synk): if profiling shows exposed per-step weight DMA, add
    # pipeline_mode=pl.Buffered(3) to the W1/W2 specs (skip on v7x if VMEM-tight).
    out2d = pl.pallas_call(
        kernel,
        out_shape=jax.ShapeDtypeStruct((M_pad, D), out_dtype),
        grid_spec=pltpu.PrefetchScalarGridSpec(
            num_scalar_prefetch=0,
            grid=(grid_m, grid_h),                              # tokens (parallel), H (reduction)
            in_specs=[
                pl.BlockSpec((tm_eff, D), lambda i, h: (i, 0)),   # x tile (resident over h)
                pl.BlockSpec((D, th_eff), lambda i, h: (0, h)),   # W1 H-tile
                pl.BlockSpec((1, th_eff), lambda i, h: (0, h)),   # b1 H-tile
                pl.BlockSpec((th_eff, D), lambda i, h: (h, 0)),   # W2 H-tile
                pl.BlockSpec((1, D), lambda i, h: (0, 0)),        # b2 (tiny, resident)
            ],
            out_specs=pl.BlockSpec((tm_eff, D), lambda i, h: (i, 0)),
            scratch_shapes=scratch,
        ),
        compiler_params=pltpu.CompilerParams(
            dimension_semantics=("parallel", "arbitrary"),
            vmem_limit_bytes=vmem_limit_bytes,
        ),
        cost_estimate=cost,
    )(x2d, w1c, b1r, w2c, b2r)

    return out2d[:M].reshape(B, T, D)


if __name__ == "__main__":
    # Shapes consistent with the module: emb_dims=128, hidden_states_factor=4.
    B, T, D = 2, 256, 128
    H = 4 * D

    key = jax.random.PRNGKey(0)
    kx, kw1, kb1, kw2, kb2 = jax.random.split(key, 5)

    x = jax.random.normal(kx, (B, T, D), dtype=jnp.float32)
    bound1 = 1.0 / math.sqrt(D)
    bound2 = 1.0 / math.sqrt(H)
    w1 = jax.random.uniform(kw1, (D, H), minval=-bound1, maxval=bound1, dtype=jnp.float32)
    b1 = jax.random.uniform(kb1, (H,), minval=-bound1, maxval=bound1, dtype=jnp.float32)
    w2 = jax.random.uniform(kw2, (H, D), minval=-bound2, maxval=bound2, dtype=jnp.float32)
    b2 = jax.random.uniform(kb2, (D,), minval=-bound2, maxval=bound2, dtype=jnp.float32)

    ref = jnp.maximum(x @ w1 + b1, 0.0) @ w2 + b2

    # 1) f32 path, H tiled into 2 reduction steps, f32 output accumulated in-place.
    out = jax.block_until_ready(feedforward(x, w1, b1, w2, b2, th=256))
    assert out.shape == (B, T, D)
    assert jnp.allclose(out, ref, atol=2e-4, rtol=2e-4)

    # 2) Ragged token count (padded-tail path; grid_m still >= 2).
    out_tail = jax.block_until_ready(feedforward(x[:, :200], w1, b1, w2, b2, th=256))
    assert jnp.allclose(out_tail, ref[:, :200], atol=2e-4, rtol=2e-4)

    # 3) bf16 compute with pre-cast weights (no per-call weight astype), bf16
    #    epilogue, bf16 output -> exercises the f32-scratch accumulator path.
    xb = x.astype(jnp.bfloat16)
    w1b, w2b = w1.astype(jnp.bfloat16), w2.astype(jnp.bfloat16)
    out_bf16 = jax.block_until_ready(
        feedforward(xb, w1b, b1, w2b, b2, th=256, epilogue_dtype=jnp.bfloat16))
    assert out_bf16.dtype == jnp.bfloat16
    assert jnp.allclose(out_bf16.astype(jnp.float32), ref, atol=7e-2, rtol=7e-2)

    # 4) Non-divisible hidden dim (H=384, th=256 -> H zero-padded to 512).
    H2 = 384
    kw1c, kb1c, kw2c, kb2c = jax.random.split(jax.random.PRNGKey(1), 4)
    c1 = 1.0 / math.sqrt(D)
    c2 = 1.0 / math.sqrt(H2)
    w1_2 = jax.random.uniform(kw1c, (D, H2), minval=-c1, maxval=c1, dtype=jnp.float32)
    b1_2 = jax.random.uniform(kb1c, (H2,), minval=-c1, maxval=c1, dtype=jnp.float32)
    w2_2 = jax.random.uniform(kw2c, (H2, D), minval=-c2, maxval=c2, dtype=jnp.float32)
    b2_2 = jax.random.uniform(kb2c, (D,), minval=-c2, maxval=c2, dtype=jnp.float32)
    ref2 = jnp.maximum(x @ w1_2 + b1_2, 0.0) @ w2_2 + b2_2
    out2 = jax.block_until_ready(feedforward(x, w1_2, b1_2, w2_2, b2_2, th=256))
    assert jnp.allclose(out2, ref2, atol=2e-4, rtol=2e-4)

    print("KERNEL_OK")
</pallas_src>

<mosaic_0001>
module attributes {stable_mosaic.version = 11 : i64} {
  func.func @_ffn_kernel_inplace(%arg0: i32, %arg1: i32, %arg2: memref<256x128xf32, #tpu.memory_space<vmem>>, %arg3: memref<128x256xf32, #tpu.memory_space<vmem>>, %arg4: memref<1x256xf32, #tpu.memory_space<vmem>>, %arg5: memref<256x128xf32, #tpu.memory_space<vmem>>, %arg6: memref<1x128xf32, #tpu.memory_space<vmem>>, %arg7: memref<256x128xf32, #tpu.memory_space<vmem>>) attributes {dimension_semantics = [#tpu.dimension_semantics<parallel>, #tpu.dimension_semantics<arbitrary>], iteration_bounds = array<i64: 2, 2>, scalar_prefetch = 0 : i64, scratch_operands = 0 : i64, tpu.core_type = #tpu.core_type<tc>, window_params = [{transform_indices = @transform_0, window_bounds = array<i64: 256, 128>}, {transform_indices = @transform_1, window_bounds = array<i64: 128, 256>}, {transform_indices = @transform_2, window_bounds = array<i64: 1, 256>}, {transform_indices = @transform_3, window_bounds = array<i64: 256, 128>}, {pipeline_mode = #tpu.pipeline_mode<synchronous>, transform_indices = @transform_4, window_bounds = array<i64: 1, 128>}, {transform_indices = @transform_5, window_bounds = array<i64: 256, 128>}]} {
    %c0_i32 = arith.constant 0 : i32
    %0 = arith.cmpi eq, %arg1, %c0_i32 : i32
    %1 = arith.extui %0 : i1 to i32
    %c0_i32_0 = arith.constant 0 : i32
    %2 = arith.cmpi ne, %1, %c0_i32_0 : i32
    scf.if %2 {
      %cst_15 = arith.constant 0.000000e+00 : f32
      %19 = vector.broadcast %cst_15 : f32 to vector<256x128xf32>
      %c0_16 = arith.constant 0 : index
      %c0_17 = arith.constant 0 : index
      %20 = vector.load %arg7[%c0_16, %c0_17] : memref<256x128xf32, #tpu.memory_space<vmem>>, vector<256x128xf32>
      tpu.vector_store %arg7[%c0_16, %c0_17], %19 {strides = array<i32>} : memref<256x128xf32, #tpu.memory_space<vmem>>, vector<256x128xf32>,
    } else {
    }
    %c0 = arith.constant 0 : index
    %c0_1 = arith.constant 0 : index
    %3 = vector.load %arg2[%c0, %c0_1] : memref<256x128xf32, #tpu.memory_space<vmem>>, vector<256x128xf32>
    %c0_2 = arith.constant 0 : index
    %c0_3 = arith.constant 0 : index
    %4 = vector.load %arg3[%c0_2, %c0_3] : memref<128x256xf32, #tpu.memory_space<vmem>>, vector<128x256xf32>
    %cst = arith.constant dense<0.000000e+00> : vector<256x256xf32>
    %5 = tpu.matmul %3, %4, %cst {dimension_numbers = #tpu.dot_dimension_numbers<[1], [0], [0], [1], [0, 0, 1, 1], [], []>} : vector<256x128xf32>, vector<128x256xf32>, vector<256x256xf32> -> vector<256x256xf32>
    %c0_4 = arith.constant 0 : index
    %c0_5 = arith.constant 0 : index
    %6 = vector.load %arg4[%c0_4, %c0_5] : memref<1x256xf32, #tpu.memory_space<vmem>>, vector<1x256xf32>
    %7 = vector.broadcast %6 : vector<1x256xf32> to vector<256x256xf32>
    %8 = arith.addf %5, %7 : vector<256x256xf32>
    %cst_6 = arith.constant 0.000000e+00 : f32
    %9 = vector.broadcast %cst_6 : f32 to vector<256x256xf32>
    %10 = arith.maximumf %8, %9 : vector<256x256xf32>
    %c0_7 = arith.constant 0 : index
    %c0_8 = arith.constant 0 : index
    %11 = vector.load %arg7[%c0_7, %c0_8] : memref<256x128xf32, #tpu.memory_space<vmem>>, vector<256x128xf32>
    %c0_9 = arith.constant 0 : index
    %c0_10 = arith.constant 0 : index
    %12 = vector.load %arg5[%c0_9, %c0_10] : memref<256x128xf32, #tpu.memory_space<vmem>>, vector<256x128xf32>
    %cst_11 = arith.constant dense<0.000000e+00> : vector<256x128xf32>
    %13 = tpu.matmul %10, %12, %cst_11 {dimension_numbers = #tpu.dot_dimension_numbers<[1], [0], [0], [1], [0, 0, 1, 1], [], []>} : vector<256x256xf32>, vector<256x128xf32>, vector<256x128xf32> -> vector<256x128xf32>
    %14 = arith.addf %11, %13 : vector<256x128xf32>
    %c0_12 = arith.constant 0 : index
    %c0_13 = arith.constant 0 : index
    %15 = vector.load %arg7[%c0_12, %c0_13] : memref<256x128xf32, #tpu.memory_space<vmem>>, vector<256x128xf32>
    tpu.vector_store %arg7[%c0_12, %c0_13], %14 {strides = array<i32>} : memref<256x128xf32, #tpu.memory_space<vmem>>, vector<256x128xf32>,
    %c1_i32 = arith.constant 1 : i32
    %16 = arith.cmpi eq, %arg1, %c1_i32 : i32
    %17 = arith.extui %16 : i1 to i32
    %c0_i32_14 = arith.constant 0 : i32
    %18 = arith.cmpi ne, %17, %c0_i32_14 : i32
    scf.if %18 {
      %c0_15 = arith.constant 0 : index
      %c0_16 = arith.constant 0 : index
      %19 = vector.load %arg7[%c0_15, %c0_16] : memref<256x128xf32, #tpu.memory_space<vmem>>, vector<256x128xf32>
      %c0_17 = arith.constant 0 : index
      %c0_18 = arith.constant 0 : index
      %20 = vector.load %arg6[%c0_17, %c0_18] : memref<1x128xf32, #tpu.memory_space<vmem>>, vector<1x128xf32>
      %21 = vector.broadcast %20 : vector<1x128xf32> to vector<256x128xf32>
      %22 = arith.addf %19, %21 : vector<256x128xf32>
      %c0_19 = arith.constant 0 : index
      %c0_20 = arith.constant 0 : index
      %23 = vector.load %arg7[%c0_19, %c0_20] : memref<256x128xf32, #tpu.memory_space<vmem>>, vector<256x128xf32>
      tpu.vector_store %arg7[%c0_19, %c0_20], %22 {strides = array<i32>} : memref<256x128xf32, #tpu.memory_space<vmem>>, vector<256x128xf32>,
    } else {
    }
    return
  }
  func.func @transform_0(%arg0: i32, %arg1: i32) -> (i32, i32) {
    %c0_i32 = arith.constant 0 : i32
    %c0_i32_0 = arith.constant 0 : i32
    return %arg0, %c0_i32 : i32, i32
  }
  func.func @transform_1(%arg0: i32, %arg1: i32) -> (i32, i32) {
    %c0_i32 = arith.constant 0 : i32
    %c0_i32_0 = arith.constant 0 : i32
    return %c0_i32, %arg1 : i32, i32
  }
  func.func @transform_2(%arg0: i32, %arg1: i32) -> (i32, i32) {
    %c0_i32 = arith.constant 0 : i32
    %c0_i32_0 = arith.constant 0 : i32
    return %c0_i32, %arg1 : i32, i32
  }
  func.func @transform_3(%arg0: i32, %arg1: i32) -> (i32, i32) {
    %c0_i32 = arith.constant 0 : i32
    %c0_i32_0 = arith.constant 0 : i32
    return %arg1, %c0_i32 : i32, i32
  }
  func.func @transform_4(%arg0: i32, %arg1: i32) -> (i32, i32) {
    %c0_i32 = arith.constant 0 : i32
    %c0_i32_0 = arith.constant 0 : i32
    %c0_i32_1 = arith.constant 0 : i32
    return %c0_i32, %c0_i32_0 : i32, i32
  }
  func.func @transform_5(%arg0: i32, %arg1: i32) -> (i32, i32) {
    %c0_i32 = arith.constant 0 : i32
    %c0_i32_0 = arith.constant 0 : i32
    return %arg0, %c0_i32 : i32, i32
  }
}

</mosaic_0001>

<llo_original>
// kernel: tpu_custom_call.1
$region0: #{tpu_custom_call.1}
  #allocation0 [shape = 'u32[]', space=smem, size = 0x4, offset = 0x4, fixed_abs, tag = 'smem constant byte address 0x4 - core index']
  #allocation1 [shape = 'u32[144,128]{1,0:T(1,128)}', space=vmem, size = 0x12000, scoped, tag = 'internal scratch']
  %s0 = inlined_call_operand.hbm [shape: f32[512,128], index: 0, kind: input, shape index: {}]
  %s1 = inlined_call_operand.hbm [shape: f32[128,512], index: 1, kind: input, shape index: {}]
  %s2 = inlined_call_operand.vmem [shape: f32[1,512], index: 2, kind: input, shape index: {}]
  %s3 = inlined_call_operand.hbm [shape: f32[512,128], index: 3, kind: input, shape index: {}]
  %s4 = inlined_call_operand.vmem [shape: f32[1,128], index: 4, kind: input, shape index: {}]
  %s5 = inlined_call_operand.hbm [shape: f32[512,128], index: 5, kind: output, shape index: {}]
  %s6 = sld [smem:[#allocation0]]
  $region73: #{tpu_custom_call.1} parent=0
    _
  %s8 = ssub.s32 1, %s6
  %s9 = scalar_select 0, %s8, %s6
  $region1: #{tpu_custom_call.1} parent=0
    #allocation2 [shape = 'u8[262144]{0}', space=vmem, size = 0x40000, scoped, tag = 'input window, operand 0']
    #allocation3 [shape = 's32[2]{0}', space=sflag, size = 0x8, scoped, tag = 'scoped memory for tpu_custom_call.1']
    #allocation4 [shape = 's32[2]{0}', space=sflag, size = 0x8, scoped, tag = 'scoped memory for tpu_custom_call.1']
    #allocation5 [shape = 'u8[262144]{0}', space=vmem, size = 0x40000, scoped, tag = 'input window, operand 1']
    #allocation6 [shape = 's32[2]{0}', space=sflag, size = 0x8, scoped, tag = 'scoped memory for tpu_custom_call.1']
    #allocation7 [shape = 'u8[262144]{0}', space=vmem, size = 0x40000, scoped, tag = 'input window, operand 3']
    #allocation8 [shape = 'u8[262144]{0}', space=vmem, size = 0x40000, scoped, tag = 'output window, operand 0']
    %10 = vsyncpa [#allocation3], 0
    %s11 = scalar_lea.sflag [#allocation3], 1
    %12 = vsyncpa %s11, 0
    %13 = vsyncpa [#allocation6], 0
    %s14 = scalar_lea.sflag [#allocation6], 1
    %15 = vsyncpa %s14, 0
    %16 = vsyncpa [#allocation4], 0
    %s17 = scalar_lea.sflag [#allocation4], 1
    %18 = vsyncpa %s17, 0
    loop: start=0, step=1, limit=6
    $region2: #{tpu_custom_call.1} parent=1 // loop_pre_header
      _
    $region3: #{tpu_custom_call.1} parent=1 // loop_header
      %s20 = sphi 0, %s24
      %p21 = scmp.ge.s32.totalorder %s20, 6
      %s27 = sphi 0, %s39
      %s28 = sphi 0, %s35
      %s29 = sphi 0, %s27
      %s30 = sphi 0, %s28
      %s31 = sphi 0, %s29
      %s32 = sphi 0, %s30
      %s42 = sphi 0, %s44
      %s45 = sphi 0, %s42
      %s46 = sphi 0, %s45
      %s62 = sphi 0, %s46
      %s68 = sphi 0, %s70
      %s71 = sphi 0, %s68
      %s72 = sphi 0, %s71
      %s88 = sphi 0, %s72
      %s94 = sphi 0, %s96
      %s97 = sphi 0, %s94
      %s98 = sphi 0, %s97
      %s114 = sphi 0, %s98
      %s120 = sphi 0, %s122
      %s123 = sphi 0, %s120
      %s124 = sphi 0, %s123
      %s140 = sphi 0, %s124
      %s144 = sphi 0, %s144
      %s146 = sphi 0, %s144
      %s147 = sphi 0, %s146
      %s161 = sphi 0, %s147
      %s167 = sphi 0, %s169
      %s170 = sphi 0, %s167
      %s171 = sphi 0, %s170
      %s187 = sphi 0, %s171
    $region4: #{tpu_custom_call.1} parent=1 // loop_header_branch
      %23 = sbr.rel (%p21) target = $region8
    $region5: #{tpu_custom_call.1} parent=1 // loop_body
      %s25 = ssub.s32 %s20, 1
      %s26 = ssub.s32 %s20, 2
      %s33 = sadd.s32 1, %s28
      %p34 = scmp.ge.s32.totalorder %s33, 2
      %s35 = scalar_select %p34, 0, %s33
      %s36 = sadd.s32 1, %s27
      %s37 = scalar_select %p34, %s36, %s27
      %p38 = scmp.ge.s32.totalorder %s37, 2
      %s39 = scalar_select %p38, 0, %s37
      %s40 = ssub.s32 %s27, %s39
      %p41 = scmp.eq.s32.totalorder %s40, 0
      %s43 = sadd.s32 %s42, 1
      %s44 = scalar_select %p41, %s42, %s43
      %p47 = pneg %p41
      %p48 = scmp.eq.s32.totalorder %s20, 3
      %p49 = por %p47, %p48
      %p50 = scmp.ne.s32.totalorder %s42, %s45
      %p51 = scmp.eq.s32.totalorder %s20, 0
      %p52 = por %p50, %p51
      %p53 = scmp.ne.s32.totalorder %s42, %s45
      %p54 = scmp.eq.s32.totalorder %s25, 3
      %p55 = por %p53, %p54
      %p56 = scmp.ne.s32.totalorder %s45, %s46
      %p57 = scmp.eq.s32.totalorder %s25, 0
      %p58 = por %p56, %p57
      %p59 = scmp.ne.s32.totalorder %s45, %s46
      %p60 = scmp.eq.s32.totalorder %s26, 3
      %p61 = por %p59, %p60
      %p63 = scmp.ne.s32.totalorder %s46, %s62
      %p64 = scmp.eq.s32.totalorder %s26, 0
      %p65 = por %p63, %p64
      %s66 = ssub.s32 %s28, %s35
      %p67 = scmp.eq.s32.totalorder %s66, 0
      %s69 = sadd.s32 %s68, 1
      %s70 = scalar_select %p67, %s68, %s69
      %p73 = pneg %p67
      %p74 = scmp.eq.s32.totalorder %s20, 3
      %p75 = por %p73, %p74
      %p76 = scmp.ne.s32.totalorder %s68, %s71
      %p77 = scmp.eq.s32.totalorder %s20, 0
      %p78 = por %p76, %p77
      %p79 = scmp.ne.s32.totalorder %s68, %s71
      %p80 = scmp.eq.s32.totalorder %s25, 3
      %p81 = por %p79, %p80
      %p82 = scmp.ne.s32.totalorder %s71, %s72
      %p83 = scmp.eq.s32.totalorder %s25, 0
      %p84 = por %p82, %p83
      %p85 = scmp.ne.s32.totalorder %s71, %s72
      %p86 = scmp.eq.s32.totalorder %s26, 3
      %p87 = por %p85, %p86
      %p89 = scmp.ne.s32.totalorder %s72, %s88
      %p90 = scmp.eq.s32.totalorder %s26, 0
      %p91 = por %p89, %p90
      %s92 = ssub.s32 %s28, %s35
      %p93 = scmp.eq.s32.totalorder %s92, 0
      %s95 = sadd.s32 %s94, 1
      %s96 = scalar_select %p93, %s94, %s95
      %p99 = pneg %p93
      %p100 = scmp.eq.s32.totalorder %s20, 3
      %p101 = por %p99, %p100
      %p102 = scmp.ne.s32.totalorder %s94, %s97
      %p103 = scmp.eq.s32.totalorder %s20, 0
      %p104 = por %p102, %p103
      %p105 = scmp.ne.s32.totalorder %s94, %s97
      %p106 = scmp.eq.s32.totalorder %s25, 3
      %p107 = por %p105, %p106
      %p108 = scmp.ne.s32.totalorder %s97, %s98
      %p109 = scmp.eq.s32.totalorder %s25, 0
      %p110 = por %p108, %p109
      %p111 = scmp.ne.s32.totalorder %s97, %s98
      %p112 = scmp.eq.s32.totalorder %s26, 3
      %p113 = por %p111, %p112
      %p115 = scmp.ne.s32.totalorder %s98, %s114
      %p116 = scmp.eq.s32.totalorder %s26, 0
      %p117 = por %p115, %p116
      %s118 = ssub.s32 %s28, %s35
      %p119 = scmp.eq.s32.totalorder %s118, 0
      %s121 = sadd.s32 %s120, 1
      %s122 = scalar_select %p119, %s120, %s121
      %p125 = pneg %p119
      %p126 = scmp.eq.s32.totalorder %s20, 3
      %p127 = por %p125, %p126
      %p128 = scmp.ne.s32.totalorder %s120, %s123
      %p129 = scmp.eq.s32.totalorder %s20, 0
      %p130 = por %p128, %p129
      %p131 = scmp.ne.s32.totalorder %s120, %s123
      %p132 = scmp.eq.s32.totalorder %s25, 3
      %p133 = por %p131, %p132
      %p134 = scmp.ne.s32.totalorder %s123, %s124
      %p135 = scmp.eq.s32.totalorder %s25, 0
      %p136 = por %p134, %p135
      %p137 = scmp.ne.s32.totalorder %s123, %s124
      %p138 = scmp.eq.s32.totalorder %s26, 3
      %p139 = por %p137, %p138
      %p141 = scmp.ne.s32.totalorder %s124, %s140
      %p142 = scmp.eq.s32.totalorder %s26, 0
      %p143 = por %p141, %p142
      %s145 = sadd.s32 %s144, 1
      %p148 = scmp.eq.s32.totalorder %s20, 3
      %p149 = scmp.ne.s32.totalorder %s144, %s146
      %p150 = scmp.eq.s32.totalorder %s20, 0
      %p151 = por %p149, %p150
      %p152 = scmp.ne.s32.totalorder %s144, %s146
      %p153 = scmp.eq.s32.totalorder %s25, 3
      %p154 = por %p152, %p153
      %p155 = scmp.ne.s32.totalorder %s146, %s147
      %p156 = scmp.eq.s32.totalorder %s25, 0
      %p157 = por %p155, %p156
      %p158 = scmp.ne.s32.totalorder %s146, %s147
      %p159 = scmp.eq.s32.totalorder %s26, 3
      %p160 = por %p158, %p159
      %p162 = scmp.ne.s32.totalorder %s147, %s161
      %p163 = scmp.eq.s32.totalorder %s26, 0
      %p164 = por %p162, %p163
      %s165 = ssub.s32 %s27, %s39
      %p166 = scmp.eq.s32.totalorder %s165, 0
      %s168 = sadd.s32 %s167, 1
      %s169 = scalar_select %p166, %s167, %s168
      %p172 = pneg %p166
      %p173 = scmp.eq.s32.totalorder %s20, 3
      %p174 = por %p172, %p173
      %p175 = scmp.ne.s32.totalorder %s167, %s170
      %p176 = scmp.eq.s32.totalorder %s20, 0
      %p177 = por %p175, %p176
      %p178 = scmp.ne.s32.totalorder %s167, %s170
      %p179 = scmp.eq.s32.totalorder %s25, 3
      %p180 = por %p178, %p179
      %p181 = scmp.ne.s32.totalorder %s170, %s171
      %p182 = scmp.eq.s32.totalorder %s25, 0
      %p183 = por %p181, %p182
      %p184 = scmp.ne.s32.totalorder %s170, %s171
      %p185 = scmp.eq.s32.totalorder %s26, 3
      %p186 = por %p184, %p185
      %p188 = scmp.ne.s32.totalorder %s171, %s187
      %p189 = scmp.eq.s32.totalorder %s26, 0
      %p190 = por %p188, %p189
      %p191 = scmp.le.s32.totalorder 1, %s20
      %p192 = scmp.lt.s32.totalorder %s20, 5
      %p193 = pnand %p191, %p192
      %p194 = pneg %p193
      // Predicated region
      $region9: #{tpu_custom_call.1} parent=5 // pred_check
        _
      $region10: #{tpu_custom_call.1} parent=5 // pred_check_branch
        %196 = sbr.rel (%p193) target = $region12
      $region11: #{tpu_custom_call.1} parent=5 // pred_region
        %s197 = ssub.s32 %s20, 1
        // Predicated region
        $region13: #{tpu_custom_call.1} parent=11 // pred_check
          %p198 = pneg %p157
        $region14: #{tpu_custom_call.1} parent=11 // pred_check_branch
          %200 = sbr.rel (%p198) target = $region16
        $region15: #{tpu_custom_call.1} parent=11 // pred_region
          _
        $region16: #{tpu_custom_call.1} parent=11 // pred_fallthru
          _
      $region12: #{tpu_custom_call.1} parent=5 // pred_fallthru
        _
      %p201 = scmp.lt.s32.totalorder %s20, 4
      // Predicated region
      $region17: #{tpu_custom_call.1} parent=5 // pred_check
        %p202 = pneg %p201
      $region18: #{tpu_custom_call.1} parent=5 // pred_check_branch
        %204 = sbr.rel (%p202) target = $region20
      $region19: #{tpu_custom_call.1} parent=5 // pred_region
        // Predicated region
        $region21: #{tpu_custom_call.1} parent=19 // pred_check
          %p205 = pneg %p52
        $region22: #{tpu_custom_call.1} parent=19 // pred_check_branch
          %207 = sbr.rel (%p205) target = $region24
        $region23: #{tpu_custom_call.1} parent=19 // pred_region
          %s208 = sand.u32 %s42, 1
          %s209 = scalar_lea.sflag [#allocation3], %s208
          %s210 = sand.u32 %s42, 1
          %s211 = smul.addr %s210, 256
          %s212 = scalar_lea.vmem [#allocation2], %s211
          %s213 = smul.u32 32, %s27
          %s215 = ssub.s32 4096, 4096
          %216 = vsyncadd %s209, %s215
          %s217 = smul.addr %s213, 128
          %s218 = scalar_lea.hbm %s0, %s217
          %s219 = sshll.u32 %s212, 4
          %s220 = int_to_ptr.vmem [resolvable:$true] %s219
          %225 = dma.hbm_to_vmem [thread:$0]  %s218, 4096, %s220, %s209, 128, 128, 8
        $region24: #{tpu_custom_call.1} parent=19 // pred_fallthru
          _
        // Predicated region
        $region25: #{tpu_custom_call.1} parent=19 // pred_check
          %p226 = pneg %p78
        $region26: #{tpu_custom_call.1} parent=19 // pred_check_branch
          %228 = sbr.rel (%p226) target = $region28
        $region27: #{tpu_custom_call.1} parent=19 // pred_region
          %s229 = sand.u32 %s20, 1
          %s230 = scalar_lea.sflag [#allocation6], %s229
          %s231 = sand.u32 %s68, 1
          %s232 = smul.addr %s231, 256
          %s233 = scalar_lea.vmem [#allocation5], %s232
          %s234 = smul.u32 2, %s28
          %s236 = ssub.s32 4096, 4096
          %237 = vsyncadd %s230, %s236
          %s238 = smul.addr %s234, 128
          %s239 = scalar_lea.hbm %s1, %s238
          %s240 = sshll.u32 %s233, 4
          %s241 = int_to_ptr.vmem [resolvable:$true] %s240
          %246 = dma.hbm_to_vmem [thread:$0]  %s239, 4096, %s241, %s230, 512, 256, 16
        $region28: #{tpu_custom_call.1} parent=19 // pred_fallthru
          _
        // Predicated region
        $region29: #{tpu_custom_call.1} parent=19 // pred_check
          %p247 = pneg %p104
        $region30: #{tpu_custom_call.1} parent=19 // pred_check_branch
          %249 = sbr.rel (%p247) target = $region32
        $region31: #{tpu_custom_call.1} parent=19 // pred_region
          %s250 = smul.u32 2, %s28
          %p251 = scmp.lt.s32.totalorder %s250, 3
          %s252 = scalar_select %p251, %s250, 3
          %s253 = scalar_lea.vmem %s2, %s252
          %s254 = smul.u32 2, %s28
        $region32: #{tpu_custom_call.1} parent=19 // pred_fallthru
          _
        // Predicated region
        $region33: #{tpu_custom_call.1} parent=19 // pred_check
          %p255 = pneg %p130
        $region34: #{tpu_custom_call.1} parent=19 // pred_check_branch
          %257 = sbr.rel (%p255) target = $region36
        $region35: #{tpu_custom_call.1} parent=19 // pred_region
          %s258 = sand.u32 %s20, 1
          %s259 = scalar_lea.sflag [#allocation6], %s258
          %s260 = sand.u32 %s120, 1
          %s261 = smul.addr %s260, 256
          %s262 = scalar_lea.vmem [#allocation7], %s261
          %s263 = smul.u32 32, %s28
          %s265 = ssub.s32 4096, 4096
          %266 = vsyncadd %s259, %s265
          %s267 = smul.addr %s263, 128
          %s268 = scalar_lea.hbm %s3, %s267
          %s269 = sshll.u32 %s262, 4
          %s270 = int_to_ptr.vmem [resolvable:$true] %s269
          %275 = dma.hbm_to_vmem [thread:$0]  %s268, 4096, %s270, %s259, 128, 128, 8
        $region36: #{tpu_custom_call.1} parent=19 // pred_fallthru
          _
      $region20: #{tpu_custom_call.1} parent=5 // pred_fallthru
        _
      %p276 = scmp.le.s32.totalorder 1, %s20
      %p277 = scmp.lt.s32.totalorder %s20, 5
      %p278 = pnand %p276, %p277
      %p279 = pneg %p278
      // Predicated region
      $region37: #{tpu_custom_call.1} parent=5 // pred_check
        _
      $region38: #{tpu_custom_call.1} parent=5 // pred_check_branch
        %281 = sbr.rel (%p278) target = $region40
      $region39: #{tpu_custom_call.1} parent=5 // pred_region
        %s282 = ssub.s32 %s20, 1
        %s283 = sand.u32 %s45, 1
        %s284 = scalar_lea.sflag [#allocation3], %s283
        %s285 = sand.u32 %s45, 1
        %s286 = smul.addr %s285, 256
        %s287 = scalar_lea.vmem [#allocation2], %s286
        // Predicated region
        $region41: #{tpu_custom_call.1} parent=39 // pred_check
          %p288 = pneg %p58
        $region42: #{tpu_custom_call.1} parent=39 // pred_check_branch
          %290 = sbr.rel (%p288) target = $region44
        $region43: #{tpu_custom_call.1} parent=39 // pred_region
          %291 = dma.done %s284, 4096
        $region44: #{tpu_custom_call.1} parent=39 // pred_fallthru
          _
        %s292 = sand.u32 %s25, 1
        %s293 = scalar_lea.sflag [#allocation6], %s292
        %s294 = sand.u32 %s71, 1
        %s295 = smul.addr %s294, 256
        %s296 = scalar_lea.vmem [#allocation5], %s295
        // Predicated region
        $region45: #{tpu_custom_call.1} parent=39 // pred_check
          %p297 = pneg %p84
        $region46: #{tpu_custom_call.1} parent=39 // pred_check_branch
          %299 = sbr.rel (%p297) target = $region48
        $region47: #{tpu_custom_call.1} parent=39 // pred_region
          %300 = dma.done %s293, 4096
        $region48: #{tpu_custom_call.1} parent=39 // pred_fallthru
          _
        %s301 = sand.u32 %s25, 1
        %s302 = scalar_lea.sflag [#allocation6], %s301
        %s303 = sand.u32 %s123, 1
        %s304 = smul.addr %s303, 256
        %s305 = scalar_lea.vmem [#allocation7], %s304
        // Predicated region
        $region49: #{tpu_custom_call.1} parent=39 // pred_check
          %p306 = pneg %p136
        $region50: #{tpu_custom_call.1} parent=39 // pred_check_branch
          %308 = sbr.rel (%p306) target = $region52
        $region51: #{tpu_custom_call.1} parent=39 // pred_region
          %309 = dma.done %s302, 4096
        $region52: #{tpu_custom_call.1} parent=39 // pred_fallthru
          _
        %s310 = sand.u32 %s45, 1
        %s311 = scalar_lea.sflag [#allocation3], %s310
        %s312 = sand.u32 %s45, 1
        %s313 = smul.addr %s312, 256
        %s314 = scalar_lea.vmem [#allocation2], %s313
        %p315 = pneg %p58
        %p316 = pneg %p55
        %s317 = sand.u32 %s25, 1
        %s318 = scalar_lea.sflag [#allocation6], %s317
        %s319 = sand.u32 %s71, 1
        %s320 = smul.addr %s319, 256
        %s321 = scalar_lea.vmem [#allocation5], %s320
        %p322 = pneg %p84
        %p323 = pneg %p81
        %s324 = smul.u32 2, %s30
        %p325 = scmp.lt.s32.totalorder %s324, 3
        %s326 = scalar_select %p325, %s324, 3
        %s327 = scalar_lea.vmem %s2, %s326
        %p328 = pneg %p110
        %p329 = pneg %p107
        %s330 = sand.u32 %s25, 1
        %s331 = scalar_lea.sflag [#allocation6], %s330
        %s332 = sand.u32 %s123, 1
        %s333 = smul.addr %s332, 256
        %s334 = scalar_lea.vmem [#allocation7], %s333
        %p335 = pneg %p136
        %p336 = pneg %p133
        %p337 = pneg %p157
        %p338 = pneg %p154
        %p339 = pneg %p183
        %p340 = pneg %p180
        %s341 = sand.u32 %s170, 1
        %s342 = scalar_lea.sflag [#allocation4], %s341
        %s343 = sand.u32 %s170, 1
        %s344 = smul.addr %s343, 256
        %s345 = scalar_lea.vmem [#allocation8], %s344
        %s346 = smul.u32 32, %s29
        %s347 = smul.u32 2, %s30
        %s348 = smul.u32 2, %s30
        %p349 = scmp.lt.s32.totalorder %s348, 3
        %s350 = scalar_select %p349, %s348, 3
        %s351 = scalar_lea.vmem %s2, %s350
        %s352 = smul.u32 2, %s30
        %s353 = smul.u32 32, %s30
        %s354 = smul.u32 32, %s29
        %p355 = scmp.eq.s32.totalorder %s30, 0
        // Predicated region
        $region53: #{tpu_custom_call.1} parent=39 // pred_check
          %p356 = pneg %p355
        $region54: #{tpu_custom_call.1} parent=39 // pred_check_branch
          %358 = sbr.rel (%p356) target = $region56
        $region55: #{tpu_custom_call.1} parent=39 // pred_region
          %359 = vst [vmem:[%s345] sm:$0xff] 0.0
          %360 = vst [vmem:[%s345 + $0x8] sm:$0xff] 0.0
          %361 = vst [vmem:[%s345 + $0x10] sm:$0xff] 0.0
          %362 = vst [vmem:[%s345 + $0x18] sm:$0xff] 0.0
          %363 = vst [vmem:[%s345 + $0x20] sm:$0xff] 0.0
          %364 = vst [vmem:[%s345 + $0x28] sm:$0xff] 0.0
          %365 = vst [vmem:[%s345 + $0x30] sm:$0xff] 0.0
          %366 = vst [vmem:[%s345 + $0x38] sm:$0xff] 0.0
          %367 = vst [vmem:[%s345 + $0x40] sm:$0xff] 0.0
          %368 = vst [vmem:[%s345 + $0x48] sm:$0xff] 0.0
          %369 = vst [vmem:[%s345 + $0x50] sm:$0xff] 0.0
          %370 = vst [vmem:[%s345 + $0x58] sm:$0xff] 0.0
          %371 = vst [vmem:[%s345 + $0x60] sm:$0xff] 0.0
          %372 = vst [vmem:[%s345 + $0x68] sm:$0xff] 0.0
          %373 = vst [vmem:[%s345 + $0x70] sm:$0xff] 0.0
          %374 = vst [vmem:[%s345 + $0x78] sm:$0xff] 0.0
          %375 = vst [vmem:[%s345 + $0x80] sm:$0xff] 0.0
          %376 = vst [vmem:[%s345 + $0x88] sm:$0xff] 0.0
          %377 = vst [vmem:[%s345 + $0x90] sm:$0xff] 0.0
          %378 = vst [vmem:[%s345 + $0x98] sm:$0xff] 0.0
          %379 = vst [vmem:[%s345 + $0xa0] sm:$0xff] 0.0
          %380 = vst [vmem:[%s345 + $0xa8] sm:$0xff] 0.0
          %381 = vst [vmem:[%s345 + $0xb0] sm:$0xff] 0.0
          %382 = vst [vmem:[%s345 + $0xb8] sm:$0xff] 0.0
          %383 = vst [vmem:[%s345 + $0xc0] sm:$0xff] 0.0
          %384 = vst [vmem:[%s345 + $0xc8] sm:$0xff] 0.0
          %385 = vst [vmem:[%s345 + $0xd0] sm:$0xff] 0.0
          %386 = vst [vmem:[%s345 + $0xd8] sm:$0xff] 0.0
          %387 = vst [vmem:[%s345 + $0xe0] sm:$0xff] 0.0
          %388 = vst [vmem:[%s345 + $0xe8] sm:$0xff] 0.0
          %389 = vst [vmem:[%s345 + $0xf0] sm:$0xff] 0.0
          %390 = vst [vmem:[%s345 + $0xf8] sm:$0xff] 0.0
        $region56: #{tpu_custom_call.1} parent=39 // pred_fallthru
          _
        %v391 = vld [vmem:[%s287] sm:$0xff]
        %v392 = vld [vmem:[%s287 + $0x8] sm:$0xff]
        %v393 = vld [vmem:[%s287 + $0x10] sm:$0xff]
        %v394 = vld [vmem:[%s287 + $0x18] sm:$0xff]
        %v395 = vld [vmem:[%s287 + $0x20] sm:$0xff]
        %v396 = vld [vmem:[%s287 + $0x28] sm:$0xff]
        %v397 = vld [vmem:[%s287 + $0x30] sm:$0xff]
        %v398 = vld [vmem:[%s287 + $0x38] sm:$0xff]
        %v399 = vld [vmem:[%s287 + $0x40] sm:$0xff]
        %v400 = vld [vmem:[%s287 + $0x48] sm:$0xff]
        %v401 = vld [vmem:[%s287 + $0x50] sm:$0xff]
        %v402 = vld [vmem:[%s287 + $0x58] sm:$0xff]
        %v403 = vld [vmem:[%s287 + $0x60] sm:$0xff]
        %v404 = vld [vmem:[%s287 + $0x68] sm:$0xff]
        %v405 = vld [vmem:[%s287 + $0x70] sm:$0xff]
        %v406 = vld [vmem:[%s287 + $0x78] sm:$0xff]
        %v407 = vld [vmem:[%s287 + $0x80] sm:$0xff]
        %v408 = vld [vmem:[%s287 + $0x88] sm:$0xff]
        %v409 = vld [vmem:[%s287 + $0x90] sm:$0xff]
        %v410 = vld [vmem:[%s287 + $0x98] sm:$0xff]
        %v411 = vld [vmem:[%s287 + $0xa0] sm:$0xff]
        %v412 = vld [vmem:[%s287 + $0xa8] sm:$0xff]
        %v413 = vld [vmem:[%s287 + $0xb0] sm:$0xff]
        %v414 = vld [vmem:[%s287 + $0xb8] sm:$0xff]
        %v415 = vld [vmem:[%s287 + $0xc0] sm:$0xff]
        %v416 = vld [vmem:[%s287 + $0xc8] sm:$0xff]
        %v417 = vld [vmem:[%s287 + $0xd0] sm:$0xff]
        %v418 = vld [vmem:[%s287 + $0xd8] sm:$0xff]
        %v419 = vld [vmem:[%s287 + $0xe0] sm:$0xff]
        %v420 = vld [vmem:[%s287 + $0xe8] sm:$0xff]
        %v421 = vld [vmem:[%s287 + $0xf0] sm:$0xff]
        %v422 = vld [vmem:[%s287 + $0xf8] sm:$0xff]
        %v423 = vld [vmem:[%s296] sm:$0xff]
        %v424 = vld [vmem:[%s296 + $0x8] sm:$0xff]
        %v425 = vld [vmem:[%s296 + $0x10] sm:$0xff]
        %v426 = vld [vmem:[%s296 + $0x18] sm:$0xff]
        %v427 = vld [vmem:[%s296 + $0x20] sm:$0xff]
        %v428 = vld [vmem:[%s296 + $0x28] sm:$0xff]
        %v429 = vld [vmem:[%s296 + $0x30] sm:$0xff]
        %v430 = vld [vmem:[%s296 + $0x38] sm:$0xff]
        %v431 = vld [vmem:[%s296 + $0x40] sm:$0xff]
        %v432 = vld [vmem:[%s296 + $0x48] sm:$0xff]
        %v433 = vld [vmem:[%s296 + $0x50] sm:$0xff]
        %v434 = vld [vmem:[%s296 + $0x58] sm:$0xff]
        %v435 = vld [vmem:[%s296 + $0x60] sm:$0xff]
        %v436 = vld [vmem:[%s296 + $0x68] sm:$0xff]
        %v437 = vld [vmem:[%s296 + $0x70] sm:$0xff]
        %v438 = vld [vmem:[%s296 + $0x78] sm:$0xff]
        %v439 = vld [vmem:[%s296 + $0x80] sm:$0xff]
        %v440 = vld [vmem:[%s296 + $0x88] sm:$0xff]
        %v441 = vld [vmem:[%s296 + $0x90] sm:$0xff]
        %v442 = vld [vmem:[%s296 + $0x98] sm:$0xff]
        %v443 = vld [vmem:[%s296 + $0xa0] sm:$0xff]
        %v444 = vld [vmem:[%s296 + $0xa8] sm:$0xff]
        %v445 = vld [vmem:[%s296 + $0xb0] sm:$0xff]
        %v446 = vld [vmem:[%s296 + $0xb8] sm:$0xff]
        %v447 = vld [vmem:[%s296 + $0xc0] sm:$0xff]
        %v448 = vld [vmem:[%s296 + $0xc8] sm:$0xff]
        %v449 = vld [vmem:[%s296 + $0xd0] sm:$0xff]
        %v450 = vld [vmem:[%s296 + $0xd8] sm:$0xff]
        %v451 = vld [vmem:[%s296 + $0xe0] sm:$0xff]
        %v452 = vld [vmem:[%s296 + $0xe8] sm:$0xff]
        %v453 = vld [vmem:[%s296 + $0xf0] sm:$0xff]
        %v454 = vld [vmem:[%s296 + $0xf8] sm:$0xff]
        %v455 = vld [vmem:[%s351] sm:$0x3]
        %v457 = vlaneseq
        %v458 = vshrl.u32 %v457, 7
        %v459 = vsub.s32 0, %v458
        %v460 = vrot.slane %v455, %v459
        %v461 = vlaneseq
        %v462 = vshrl.u32 %v461, 7
        %v463 = vsub.s32 1, %v462
        %v464 = vrot.slane %v455, %v463
        %467 = vmatprep.subr.mxu0 %v424
        %468 = vmatpush1.msra.mxu0 %v423
        %469 = vmatprep.subr.mxu0 %v426
        %470 = vmatpush1.msra.mxu0 %v425
        %471 = vmatprep.subr.mxu0 %v428
        %472 = vmatpush1.msra.mxu0 %v427
        %473 = vmatprep.subr.mxu0 %v430
        %474 = vmatpush1.msra.mxu0 %v429
        %475 = vmatprep.subr.mxu0 %v432
        %476 = vmatpush1.msra.mxu0 %v431
        %477 = vmatprep.subr.mxu0 %v434
        %478 = vmatpush1.msra.mxu0 %v433
        %479 = vmatprep.subr.mxu0 %v436
        %480 = vmatpush1.msra.mxu0 %v435
        %481 = vmatprep.subr.mxu0 %v438
        %482 = vmatpush1.msra.mxu0 %v437
        %483 = vmatprep.subr.mxu0 %v440
        %484 = vmatpush1.msra.mxu0 %v439
        %485 = vmatprep.subr.mxu0 %v442
        %486 = vmatpush1.msra.mxu0 %v441
        %487 = vmatprep.subr.mxu0 %v444
        %488 = vmatpush1.msra.mxu0 %v443
        %489 = vmatprep.subr.mxu0 %v446
        %490 = vmatpush1.msra.mxu0 %v445
        %491 = vmatprep.subr.mxu0 %v448
        %492 = vmatpush1.msra.mxu0 %v447
        %493 = vmatprep.subr.mxu0 %v450
        %494 = vmatpush1.msra.mxu0 %v449
        %495 = vmatprep.subr.mxu0 %v452
        %496 = vmatpush1.msra.mxu0 %v451
        %497 = vmatprep.subr.mxu0 %v454
        %498 = vmatpush1.msra.mxu0 %v453
        %499 = vmatprep.subr.mxu0 0.0
        %500 = vmatpush1.msra.mxu0 0.0
        %501 = vmatprep.subr.mxu0 0.0
        %502 = vmatpush1.msra.mxu0 0.0
        %503 = vmatprep.subr.mxu0 0.0
        %504 = vmatpush1.msra.mxu0 0.0
        %505 = vmatprep.subr.mxu0 0.0
        %506 = vmatpush1.msra.mxu0 0.0
        %507 = vmatprep.subr.mxu0 0.0
        %508 = vmatpush1.msra.mxu0 0.0
        %509 = vmatprep.subr.mxu0 0.0
        %510 = vmatpush1.msra.mxu0 0.0
        %511 = vmatprep.subr.mxu0 0.0
        %512 = vmatpush1.msra.mxu0 0.0
        %513 = vmatprep.subr.mxu0 0.0
        %514 = vmatpush1.msra.mxu0 0.0
        %515 = vmatprep.subr.mxu0 0.0
        %516 = vmatpush1.msra.mxu0 0.0
        %517 = vmatprep.subr.mxu0 0.0
        %518 = vmatpush1.msra.mxu0 0.0
        %519 = vmatprep.subr.mxu0 0.0
        %520 = vmatpush1.msra.mxu0 0.0
        %521 = vmatprep.subr.mxu0 0.0
        %522 = vmatpush1.msra.mxu0 0.0
        %523 = vmatprep.subr.mxu0 0.0
        %524 = vmatpush1.msra.mxu0 0.0
        %525 = vmatprep.subr.mxu0 0.0
        %526 = vmatpush1.msra.mxu0 0.0
        %527 = vmatprep.subr.mxu0 0.0
        %528 = vmatpush1.msra.mxu0 0.0
        %529 = vmatprep.subr.mxu0 0.0
        %530 = vmatpush1.msra.mxu0 0.0
        %531 = vmatprep.mubr.f32.mxu0 0.0
        %532 = vmatmul.mubr.f32.gmra.mrb[0].mxu0 %v391
        %v533 = vpop.f32.mrb[0].mxu0
        %v534 = vadd.f32 %v460, %v533
        %v535 = vpop.f32.mrb[0].mxu0
        %v536 = vadd.f32 %v464, %v535
        %537 = vmatprep.mubr.f32.mxu0 0.0
        %538 = vmatmul.mubr.f32.gmra.mrb[0].mxu0 %v392
        %v539 = vpop.f32.mrb[0].mxu0
        %v540 = vadd.f32 %v460, %v539
        %v541 = vpop.f32.mrb[0].mxu0
        %v542 = vadd.f32 %v464, %v541
        %543 = vmatprep.mubr.f32.mxu0 0.0
        %544 = vmatmul.mubr.f32.gmra.mrb[0].mxu0 %v393
        %v545 = vpop.f32.mrb[0].mxu0
        %v546 = vadd.f32 %v460, %v545
        %v547 = vpop.f32.mrb[0].mxu0
        %v548 = vadd.f32 %v464, %v547
        %549 = vmatprep.mubr.f32.mxu0 0.0
        %550 = vmatmul.mubr.f32.gmra.mrb[0].mxu0 %v394
        %v551 = vpop.f32.mrb[0].mxu0
        %v552 = vadd.f32 %v460, %v551
        %v553 = vpop.f32.mrb[0].mxu0
        %v554 = vadd.f32 %v464, %v553
        %555 = vmatprep.mubr.f32.mxu0 0.0
        %556 = vmatmul.mubr.f32.gmra.mrb[0].mxu0 %v395
        %v557 = vpop.f32.mrb[0].mxu0
        %v558 = vadd.f32 %v460, %v557
        %v559 = vpop.f32.mrb[0].mxu0
        %v560 = vadd.f32 %v464, %v559
        %561 = vmatprep.mubr.f32.mxu0 0.0
        %562 = vmatmul.mubr.f32.gmra.mrb[0].mxu0 %v396
        %v563 = vpop.f32.mrb[0].mxu0
        %v564 = vadd.f32 %v460, %v563
        %v565 = vpop.f32.mrb[0].mxu0
        %v566 = vadd.f32 %v464, %v565
        %567 = vmatprep.mubr.f32.mxu0 0.0
        %568 = vmatmul.mubr.f32.gmra.mrb[0].mxu0 %v397
        %v569 = vpop.f32.mrb[0].mxu0
        %v570 = vadd.f32 %v460, %v569
        %v571 = vpop.f32.mrb[0].mxu0
        %v572 = vadd.f32 %v464, %v571
        %573 = vmatprep.mubr.f32.mxu0 0.0
        %574 = vmatmul.mubr.f32.gmra.mrb[0].mxu0 %v398
        %v575 = vpop.f32.mrb[0].mxu0
        %v576 = vadd.f32 %v460, %v575
        %v577 = vpop.f32.mrb[0].mxu0
        %v578 = vadd.f32 %v464, %v577
        %579 = vmatprep.mubr.f32.mxu0 0.0
        %580 = vmatmul.mubr.f32.gmra.mrb[0].mxu0 %v399
        %v581 = vpop.f32.mrb[0].mxu0
        %v582 = vadd.f32 %v460, %v581
        %v583 = vpop.f32.mrb[0].mxu0
        %v584 = vadd.f32 %v464, %v583
        %585 = vmatprep.mubr.f32.mxu0 0.0
        %586 = vmatmul.mubr.f32.gmra.mrb[0].mxu0 %v400
        %v587 = vpop.f32.mrb[0].mxu0
        %v588 = vadd.f32 %v460, %v587
        %v589 = vpop.f32.mrb[0].mxu0
        %v590 = vadd.f32 %v464, %v589
        %591 = vmatprep.mubr.f32.mxu0 0.0
        %592 = vmatmul.mubr.f32.gmra.mrb[0].mxu0 %v401
        %v593 = vpop.f32.mrb[0].mxu0
        %v594 = vadd.f32 %v460, %v593
        %v595 = vpop.f32.mrb[0].mxu0
        %v596 = vadd.f32 %v464, %v595
        %597 = vmatprep.mubr.f32.mxu0 0.0
        %598 = vmatmul.mubr.f32.gmra.mrb[0].mxu0 %v402
        %v599 = vpop.f32.mrb[0].mxu0
        %v600 = vadd.f32 %v460, %v599
        %v601 = vpop.f32.mrb[0].mxu0
        %v602 = vadd.f32 %v464, %v601
        %603 = vmatprep.mubr.f32.mxu0 0.0
        %604 = vmatmul.mubr.f32.gmra.mrb[0].mxu0 %v403
        %v605 = vpop.f32.mrb[0].mxu0
        %v606 = vadd.f32 %v460, %v605
        %v607 = vpop.f32.mrb[0].mxu0
        %v608 = vadd.f32 %v464, %v607
        %609 = vmatprep.mubr.f32.mxu0 0.0
        %610 = vmatmul.mubr.f32.gmra.mrb[0].mxu0 %v404
        %v611 = vpop.f32.mrb[0].mxu0
        %v612 = vadd.f32 %v460, %v611
        %v613 = vpop.f32.mrb[0].mxu0
        %v614 = vadd.f32 %v464, %v613
        %615 = vmatprep.mubr.f32.mxu0 0.0
        %616 = vmatmul.mubr.f32.gmra.mrb[0].mxu0 %v405
        %v617 = vpop.f32.mrb[0].mxu0
        %v618 = vadd.f32 %v460, %v617
        %v619 = vpop.f32.mrb[0].mxu0
        %v620 = vadd.f32 %v464, %v619
        %621 = vmatprep.mubr.f32.mxu0 0.0
        %622 = vmatmul.mubr.f32.gmra.mrb[0].mxu0 %v406
        %v623 = vpop.f32.mrb[0].mxu0
        %v624 = vadd.f32 %v460, %v623
        %v625 = vpop.f32.mrb[0].mxu0
        %v626 = vadd.f32 %v464, %v625
        %627 = vmatprep.mubr.f32.mxu0 0.0
        %628 = vmatmul.mubr.f32.gmra.mrb[0].mxu0 %v407
        %v629 = vpop.f32.mrb[0].mxu0
        %v630 = vadd.f32 %v460, %v629
        %v631 = vpop.f32.mrb[0].mxu0
        %v632 = vadd.f32 %v464, %v631
        %633 = vmatprep.mubr.f32.mxu0 0.0
        %634 = vmatmul.mubr.f32.gmra.mrb[0].mxu0 %v408
        %v635 = vpop.f32.mrb[0].mxu0
        %v636 = vadd.f32 %v460, %v635
        %v637 = vpop.f32.mrb[0].mxu0
        %v638 = vadd.f32 %v464, %v637
        %639 = vmatprep.mubr.f32.mxu0 0.0
        %640 = vmatmul.mubr.f32.gmra.mrb[0].mxu0 %v409
        %v641 = vpop.f32.mrb[0].mxu0
        %v642 = vadd.f32 %v460, %v641
        %v643 = vpop.f32.mrb[0].mxu0
        %v644 = vadd.f32 %v464, %v643
        %645 = vmatprep.mubr.f32.mxu0 0.0
        %646 = vmatmul.mubr.f32.gmra.mrb[0].mxu0 %v410
        %v647 = vpop.f32.mrb[0].mxu0
        %v648 = vadd.f32 %v460, %v647
        %v649 = vpop.f32.mrb[0].mxu0
        %v650 = vadd.f32 %v464, %v649
        %651 = vmatprep.mubr.f32.mxu0 0.0
        %652 = vmatmul.mubr.f32.gmra.mrb[0].mxu0 %v411
        %v653 = vpop.f32.mrb[0].mxu0
        %v654 = vadd.f32 %v460, %v653
        %v655 = vpop.f32.mrb[0].mxu0
        %v656 = vadd.f32 %v464, %v655
        %657 = vmatprep.mubr.f32.mxu0 0.0
        %658 = vmatmul.mubr.f32.gmra.mrb[0].mxu0 %v412
        %v659 = vpop.f32.mrb[0].mxu0
        %v660 = vadd.f32 %v460, %v659
        %v661 = vpop.f32.mrb[0].mxu0
        %v662 = vadd.f32 %v464, %v661
        %663 = vmatprep.mubr.f32.mxu0 0.0
        %664 = vmatmul.mubr.f32.gmra.mrb[0].mxu0 %v413
        %v665 = vpop.f32.mrb[0].mxu0
        %v666 = vadd.f32 %v460, %v665
        %v667 = vpop.f32.mrb[0].mxu0
        %v668 = vadd.f32 %v464, %v667
        %669 = vmatprep.mubr.f32.mxu0 0.0
        %670 = vmatmul.mubr.f32.gmra.mrb[0].mxu0 %v414
        %v671 = vpop.f32.mrb[0].mxu0
        %v672 = vadd.f32 %v460, %v671
        %v673 = vpop.f32.mrb[0].mxu0
        %v674 = vadd.f32 %v464, %v673
        %675 = vmatprep.mubr.f32.mxu0 0.0
        %676 = vmatmul.mubr.f32.gmra.mrb[0].mxu0 %v415
        %v677 = vpop.f32.mrb[0].mxu0
        %v678 = vadd.f32 %v460, %v677
        %v679 = vpop.f32.mrb[0].mxu0
        %v680 = vadd.f32 %v464, %v679
        %681 = vmatprep.mubr.f32.mxu0 0.0
        %682 = vmatmul.mubr.f32.gmra.mrb[0].mxu0 %v416
        %v683 = vpop.f32.mrb[0].mxu0
        %v684 = vadd.f32 %v460, %v683
        %v685 = vpop.f32.mrb[0].mxu0
        %v686 = vadd.f32 %v464, %v685
        %687 = vmatprep.mubr.f32.mxu0 0.0
        %688 = vmatmul.mubr.f32.gmra.mrb[0].mxu0 %v417
        %v689 = vpop.f32.mrb[0].mxu0
        %v690 = vadd.f32 %v460, %v689
        %v691 = vpop.f32.mrb[0].mxu0
        %v692 = vadd.f32 %v464, %v691
        %693 = vmatprep.mubr.f32.mxu0 0.0
        %694 = vmatmul.mubr.f32.gmra.mrb[0].mxu0 %v418
        %v695 = vpop.f32.mrb[0].mxu0
        %v696 = vadd.f32 %v460, %v695
        %v697 = vpop.f32.mrb[0].mxu0
        %v698 = vadd.f32 %v464, %v697
        %699 = vmatprep.mubr.f32.mxu0 0.0
        %700 = vmatmul.mubr.f32.gmra.mrb[0].mxu0 %v419
        %v701 = vpop.f32.mrb[0].mxu0
        %v702 = vadd.f32 %v460, %v701
        %v703 = vpop.f32.mrb[0].mxu0
        %v704 = vadd.f32 %v464, %v703
        %705 = vmatprep.mubr.f32.mxu0 0.0
        %706 = vmatmul.mubr.f32.gmra.mrb[0].mxu0 %v420
        %v707 = vpop.f32.mrb[0].mxu0
        %v708 = vadd.f32 %v460, %v707
        %v709 = vpop.f32.mrb[0].mxu0
        %v710 = vadd.f32 %v464, %v709
        %711 = vmatprep.mubr.f32.mxu0 0.0
        %712 = vmatmul.mubr.f32.gmra.mrb[0].mxu0 %v421
        %v713 = vpop.f32.mrb[0].mxu0
        %v714 = vadd.f32 %v460, %v713
        %v715 = vpop.f32.mrb[0].mxu0
        %v716 = vadd.f32 %v464, %v715
        %717 = vmatprep.mubr.f32.mxu0 0.0
        %718 = vmatmul.mubr.f32.gmra.mrb[0].mxu0 %v422
        %v719 = vpop.f32.mrb[0].mxu0
        %v720 = vadd.f32 %v460, %v719
        %v721 = vpop.f32.mrb[0].mxu0
        %v722 = vadd.f32 %v464, %v721
        %723 = vdwg.mxu0
        %v724 = vmax.f32 %v534, 0.0
        %v725 = vmax.f32 %v536, 0.0
        %v726 = vmax.f32 %v540, 0.0
        %v727 = vmax.f32 %v542, 0.0
        %v728 = vmax.f32 %v546, 0.0
        %v729 = vmax.f32 %v548, 0.0
        %v730 = vmax.f32 %v552, 0.0
        %v731 = vmax.f32 %v554, 0.0
        %v732 = vmax.f32 %v558, 0.0
        %v733 = vmax.f32 %v560, 0.0
        %v734 = vmax.f32 %v564, 0.0
        %v735 = vmax.f32 %v566, 0.0
        %v736 = vmax.f32 %v570, 0.0
        %v737 = vmax.f32 %v572, 0.0
        %v738 = vmax.f32 %v576, 0.0
        %v739 = vmax.f32 %v578, 0.0
        %v740 = vmax.f32 %v582, 0.0
        %v741 = vmax.f32 %v584, 0.0
        %v742 = vmax.f32 %v588, 0.0
        %v743 = vmax.f32 %v590, 0.0
        %v744 = vmax.f32 %v594, 0.0
        %v745 = vmax.f32 %v596, 0.0
        %v746 = vmax.f32 %v600, 0.0
        %v747 = vmax.f32 %v602, 0.0
        %v748 = vmax.f32 %v606, 0.0
        %v749 = vmax.f32 %v608, 0.0
        %v750 = vmax.f32 %v612, 0.0
        %v751 = vmax.f32 %v614, 0.0
        %v752 = vmax.f32 %v618, 0.0
        %v753 = vmax.f32 %v620, 0.0
        %v754 = vmax.f32 %v624, 0.0
        %v755 = vmax.f32 %v626, 0.0
        %v756 = vmax.f32 %v630, 0.0
        %v757 = vmax.f32 %v632, 0.0
        %v758 = vmax.f32 %v636, 0.0
        %v759 = vmax.f32 %v638, 0.0
        %v760 = vmax.f32 %v642, 0.0
        %v761 = vmax.f32 %v644, 0.0
        %v762 = vmax.f32 %v648, 0.0
        %v763 = vmax.f32 %v650, 0.0
        %v764 = vmax.f32 %v654, 0.0
        %v765 = vmax.f32 %v656, 0.0
        %v766 = vmax.f32 %v660, 0.0
        %v767 = vmax.f32 %v662, 0.0
        %v768 = vmax.f32 %v666, 0.0
        %v769 = vmax.f32 %v668, 0.0
        %v770 = vmax.f32 %v672, 0.0
        %v771 = vmax.f32 %v674, 0.0
        %v772 = vmax.f32 %v678, 0.0
        %v773 = vmax.f32 %v680, 0.0
        %v774 = vmax.f32 %v684, 0.0
        %v775 = vmax.f32 %v686, 0.0
        %v776 = vmax.f32 %v690, 0.0
        %v777 = vmax.f32 %v692, 0.0
        %v778 = vmax.f32 %v696, 0.0
        %v779 = vmax.f32 %v698, 0.0
        %v780 = vmax.f32 %v702, 0.0
        %v781 = vmax.f32 %v704, 0.0
        %v782 = vmax.f32 %v708, 0.0
        %v783 = vmax.f32 %v710, 0.0
        %v784 = vmax.f32 %v714, 0.0
        %v785 = vmax.f32 %v716, 0.0
        %v786 = vmax.f32 %v720, 0.0
        %v787 = vmax.f32 %v722, 0.0
        %v788 = vld [vmem:[%s345] sm:$0xff]
        %v789 = vld [vmem:[%s345 + $0x8] sm:$0xff]
        %v790 = vld [vmem:[%s345 + $0x10] sm:$0xff]
        %v791 = vld [vmem:[%s345 + $0x18] sm:$0xff]
        %v792 = vld [vmem:[%s345 + $0x20] sm:$0xff]
        %v793 = vld [vmem:[%s345 + $0x28] sm:$0xff]
        %v794 = vld [vmem:[%s345 + $0x30] sm:$0xff]
        %v795 = vld [vmem:[%s345 + $0x38] sm:$0xff]
        %v796 = vld [vmem:[%s345 + $0x40] sm:$0xff]
        %v797 = vld [vmem:[%s345 + $0x48] sm:$0xff]
        %v798 = vld [vmem:[%s345 + $0x50] sm:$0xff]
        %v799 = vld [vmem:[%s345 + $0x58] sm:$0xff]
        %v800 = vld [vmem:[%s345 + $0x60] sm:$0xff]
        %v801 = vld [vmem:[%s345 + $0x68] sm:$0xff]
        %v802 = vld [vmem:[%s345 + $0x70] sm:$0xff]
        %v803 = vld [vmem:[%s345 + $0x78] sm:$0xff]
        %v804 = vld [vmem:[%s345 + $0x80] sm:$0xff]
        %v805 = vld [vmem:[%s345 + $0x88] sm:$0xff]
        %v806 = vld [vmem:[%s345 + $0x90] sm:$0xff]
        %v807 = vld [vmem:[%s345 + $0x98] sm:$0xff]
        %v808 = vld [vmem:[%s345 + $0xa0] sm:$0xff]
        %v809 = vld [vmem:[%s345 + $0xa8] sm:$0xff]
        %v810 = vld [vmem:[%s345 + $0xb0] sm:$0xff]
        %v811 = vld [vmem:[%s345 + $0xb8] sm:$0xff]
        %v812 = vld [vmem:[%s345 + $0xc0] sm:$0xff]
        %v813 = vld [vmem:[%s345 + $0xc8] sm:$0xff]
        %v814 = vld [vmem:[%s345 + $0xd0] sm:$0xff]
        %v815 = vld [vmem:[%s345 + $0xd8] sm:$0xff]
        %v816 = vld [vmem:[%s345 + $0xe0] sm:$0xff]
        %v817 = vld [vmem:[%s345 + $0xe8] sm:$0xff]
        %v818 = vld [vmem:[%s345 + $0xf0] sm:$0xff]
        %v819 = vld [vmem:[%s345 + $0xf8] sm:$0xff]
        %v820 = vld [vmem:[%s305] sm:$0xff]
        %v821 = vld [vmem:[%s305 + $0x8] sm:$0xff]
        %v822 = vld [vmem:[%s305 + $0x10] sm:$0xff]
        %v823 = vld [vmem:[%s305 + $0x18] sm:$0xff]
        %v824 = vld [vmem:[%s305 + $0x20] sm:$0xff]
        %v825 = vld [vmem:[%s305 + $0x28] sm:$0xff]
        %v826 = vld [vmem:[%s305 + $0x30] sm:$0xff]
        %v827 = vld [vmem:[%s305 + $0x38] sm:$0xff]
        %v828 = vld [vmem:[%s305 + $0x40] sm:$0xff]
        %v829 = vld [vmem:[%s305 + $0x48] sm:$0xff]
        %v830 = vld [vmem:[%s305 + $0x50] sm:$0xff]
        %v831 = vld [vmem:[%s305 + $0x58] sm:$0xff]
        %v832 = vld [vmem:[%s305 + $0x60] sm:$0xff]
        %v833 = vld [vmem:[%s305 + $0x68] sm:$0xff]
        %v834 = vld [vmem:[%s305 + $0x70] sm:$0xff]
        %v835 = vld [vmem:[%s305 + $0x78] sm:$0xff]
        %v836 = vld [vmem:[%s305 + $0x80] sm:$0xff]
        %v837 = vld [vmem:[%s305 + $0x88] sm:$0xff]
        %v838 = vld [vmem:[%s305 + $0x90] sm:$0xff]
        %v839 = vld [vmem:[%s305 + $0x98] sm:$0xff]
        %v840 = vld [vmem:[%s305 + $0xa0] sm:$0xff]
        %v841 = vld [vmem:[%s305 + $0xa8] sm:$0xff]
        %v842 = vld [vmem:[%s305 + $0xb0] sm:$0xff]
        %v843 = vld [vmem:[%s305 + $0xb8] sm:$0xff]
        %v844 = vld [vmem:[%s305 + $0xc0] sm:$0xff]
        %v845 = vld [vmem:[%s305 + $0xc8] sm:$0xff]
        %v846 = vld [vmem:[%s305 + $0xd0] sm:$0xff]
        %v847 = vld [vmem:[%s305 + $0xd8] sm:$0xff]
        %v848 = vld [vmem:[%s305 + $0xe0] sm:$0xff]
        %v849 = vld [vmem:[%s305 + $0xe8] sm:$0xff]
        %v850 = vld [vmem:[%s305 + $0xf0] sm:$0xff]
        %v851 = vld [vmem:[%s305 + $0xf8] sm:$0xff]
        %852 = vmatprep.subr.mxu0 0.0
        %853 = vmatpush1.msra.mxu0 %v820
        %854 = vmatprep.subr.mxu0 0.0
        %855 = vmatpush1.msra.mxu0 %v821
        %856 = vmatprep.subr.mxu0 0.0
        %857 = vmatpush1.msra.mxu0 %v822
        %858 = vmatprep.subr.mxu0 0.0
        %859 = vmatpush1.msra.mxu0 %v823
        %860 = vmatprep.subr.mxu0 0.0
        %861 = vmatpush1.msra.mxu0 %v824
        %862 = vmatprep.subr.mxu0 0.0
        %863 = vmatpush1.msra.mxu0 %v825
        %864 = vmatprep.subr.mxu0 0.0
        %865 = vmatpush1.msra.mxu0 %v826
        %866 = vmatprep.subr.mxu0 0.0
        %867 = vmatpush1.msra.mxu0 %v827
        %868 = vmatprep.subr.mxu0 0.0
        %869 = vmatpush1.msra.mxu0 %v828
        %870 = vmatprep.subr.mxu0 0.0
        %871 = vmatpush1.msra.mxu0 %v829
        %872 = vmatprep.subr.mxu0 0.0
        %873 = vmatpush1.msra.mxu0 %v830
        %874 = vmatprep.subr.mxu0 0.0
        %875 = vmatpush1.msra.mxu0 %v831
        %876 = vmatprep.subr.mxu0 0.0
        %877 = vmatpush1.msra.mxu0 %v832
        %878 = vmatprep.subr.mxu0 0.0
        %879 = vmatpush1.msra.mxu0 %v833
        %880 = vmatprep.subr.mxu0 0.0
        %881 = vmatpush1.msra.mxu0 %v834
        %882 = vmatprep.subr.mxu0 0.0
        %883 = vmatpush1.msra.mxu0 %v835
        %884 = vmatprep.subr.mxu0 0.0
        %885 = vmatpush1.msra.mxu0 %v836
        %886 = vmatprep.subr.mxu0 0.0
        %887 = vmatpush1.msra.mxu0 %v837
        %888 = vmatprep.subr.mxu0 0.0
        %889 = vmatpush1.msra.mxu0 %v838
        %890 = vmatprep.subr.mxu0 0.0
        %891 = vmatpush1.msra.mxu0 %v839
        %892 = vmatprep.subr.mxu0 0.0
        %893 = vmatpush1.msra.mxu0 %v840
        %894 = vmatprep.subr.mxu0 0.0
        %895 = vmatpush1.msra.mxu0 %v841
        %896 = vmatprep.subr.mxu0 0.0
        %897 = vmatpush1.msra.mxu0 %v842
        %898 = vmatprep.subr.mxu0 0.0
        %899 = vmatpush1.msra.mxu0 %v843
        %900 = vmatprep.subr.mxu0 0.0
        %901 = vmatpush1.msra.mxu0 %v844
        %902 = vmatprep.subr.mxu0 0.0
        %903 = vmatpush1.msra.mxu0 %v845
        %904 = vmatprep.subr.mxu0 0.0
        %905 = vmatpush1.msra.mxu0 %v846
        %906 = vmatprep.subr.mxu0 0.0
        %907 = vmatpush1.msra.mxu0 %v847
        %908 = vmatprep.subr.mxu0 0.0
        %909 = vmatpush1.msra.mxu0 %v848
        %910 = vmatprep.subr.mxu0 0.0
        %911 = vmatpush1.msra.mxu0 %v849
        %912 = vmatprep.subr.mxu0 0.0
        %913 = vmatpush1.msra.mxu0 %v850
        %914 = vmatprep.subr.mxu0 0.0
        %915 = vmatpush1.msra.mxu0 %v851
        %916 = vmatprep.mubr.f32.mxu0 %v725
        %917 = vmatmul.mubr.f32.gmra.mrb[0].mxu0 %v724
        %v918 = vpop.f32.mrb[0].mxu0
        %v919 = vadd.f32 0.0, %v918
        %v920 = vpop.f32.mrb[0].mxu0
        %921 = vmatprep.mubr.f32.mxu0 %v727
        %922 = vmatmul.mubr.f32.gmra.mrb[0].mxu0 %v726
        %v923 = vpop.f32.mrb[0].mxu0
        %v924 = vadd.f32 0.0, %v923
        %v925 = vpop.f32.mrb[0].mxu0
        %926 = vmatprep.mubr.f32.mxu0 %v729
        %927 = vmatmul.mubr.f32.gmra.mrb[0].mxu0 %v728
        %v928 = vpop.f32.mrb[0].mxu0
        %v929 = vadd.f32 0.0, %v928
        %v930 = vpop.f32.mrb[0].mxu0
        %931 = vmatprep.mubr.f32.mxu0 %v731
        %932 = vmatmul.mubr.f32.gmra.mrb[0].mxu0 %v730
        %v933 = vpop.f32.mrb[0].mxu0
        %v934 = vadd.f32 0.0, %v933
        %v935 = vpop.f32.mrb[0].mxu0
        %936 = vmatprep.mubr.f32.mxu0 %v733
        %937 = vmatmul.mubr.f32.gmra.mrb[0].mxu0 %v732
        %v938 = vpop.f32.mrb[0].mxu0
        %v939 = vadd.f32 0.0, %v938
        %v940 = vpop.f32.mrb[0].mxu0
        %941 = vmatprep.mubr.f32.mxu0 %v735
        %942 = vmatmul.mubr.f32.gmra.mrb[0].mxu0 %v734
        %v943 = vpop.f32.mrb[0].mxu0
        %v944 = vadd.f32 0.0, %v943
        %v945 = vpop.f32.mrb[0].mxu0
        %946 = vmatprep.mubr.f32.mxu0 %v737
        %947 = vmatmul.mubr.f32.gmra.mrb[0].mxu0 %v736
        %v948 = vpop.f32.mrb[0].mxu0
        %v949 = vadd.f32 0.0, %v948
        %v950 = vpop.f32.mrb[0].mxu0
        %951 = vmatprep.mubr.f32.mxu0 %v739
        %952 = vmatmul.mubr.f32.gmra.mrb[0].mxu0 %v738
        %v953 = vpop.f32.mrb[0].mxu0
        %v954 = vadd.f32 0.0, %v953
        %v955 = vpop.f32.mrb[0].mxu0
        %956 = vmatprep.mubr.f32.mxu0 %v741
        %957 = vmatmul.mubr.f32.gmra.mrb[0].mxu0 %v740
        %v958 = vpop.f32.mrb[0].mxu0
        %v959 = vadd.f32 0.0, %v958
        %v960 = vpop.f32.mrb[0].mxu0
        %961 = vmatprep.mubr.f32.mxu0 %v743
        %962 = vmatmul.mubr.f32.gmra.mrb[0].mxu0 %v742
        %v963 = vpop.f32.mrb[0].mxu0
        %v964 = vadd.f32 0.0, %v963
        %v965 = vpop.f32.mrb[0].mxu0
        %966 = vmatprep.mubr.f32.mxu0 %v745
        %967 = vmatmul.mubr.f32.gmra.mrb[0].mxu0 %v744
        %v968 = vpop.f32.mrb[0].mxu0
        %v969 = vadd.f32 0.0, %v968
        %v970 = vpop.f32.mrb[0].mxu0
        %971 = vmatprep.mubr.f32.mxu0 %v747
        %972 = vmatmul.mubr.f32.gmra.mrb[0].mxu0 %v746
        %v973 = vpop.f32.mrb[0].mxu0
        %v974 = vadd.f32 0.0, %v973
        %v975 = vpop.f32.mrb[0].mxu0
        %976 = vmatprep.mubr.f32.mxu0 %v749
        %977 = vmatmul.mubr.f32.gmra.mrb[0].mxu0 %v748
        %v978 = vpop.f32.mrb[0].mxu0
        %v979 = vadd.f32 0.0, %v978
        %v980 = vpop.f32.mrb[0].mxu0
        %981 = vmatprep.mubr.f32.mxu0 %v751
        %982 = vmatmul.mubr.f32.gmra.mrb[0].mxu0 %v750
        %v983 = vpop.f32.mrb[0].mxu0
        %v984 = vadd.f32 0.0, %v983
        %v985 = vpop.f32.mrb[0].mxu0
        %986 = vmatprep.mubr.f32.mxu0 %v753
        %987 = vmatmul.mubr.f32.gmra.mrb[0].mxu0 %v752
        %v988 = vpop.f32.mrb[0].mxu0
        %v989 = vadd.f32 0.0, %v988
        %v990 = vpop.f32.mrb[0].mxu0
        %991 = vmatprep.mubr.f32.mxu0 %v755
        %992 = vmatmul.mubr.f32.gmra.mrb[0].mxu0 %v754
        %v993 = vpop.f32.mrb[0].mxu0
        %v994 = vadd.f32 0.0, %v993
        %v995 = vpop.f32.mrb[0].mxu0
        %996 = vmatprep.mubr.f32.mxu0 %v757
        %997 = vmatmul.mubr.f32.gmra.mrb[0].mxu0 %v756
        %v998 = vpop.f32.mrb[0].mxu0
        %v999 = vadd.f32 0.0, %v998
        %v1000 = vpop.f32.mrb[0].mxu0
        %1001 = vmatprep.mubr.f32.mxu0 %v759
        %1002 = vmatmul.mubr.f32.gmra.mrb[0].mxu0 %v758
        %v1003 = vpop.f32.mrb[0].mxu0
        %v1004 = vadd.f32 0.0, %v1003
        %v1005 = vpop.f32.mrb[0].mxu0
        %1006 = vmatprep.mubr.f32.mxu0 %v761
        %1007 = vmatmul.mubr.f32.gmra.mrb[0].mxu0 %v760
        %v1008 = vpop.f32.mrb[0].mxu0
        %v1009 = vadd.f32 0.0, %v1008
        %v1010 = vpop.f32.mrb[0].mxu0
        %1011 = vmatprep.mubr.f32.mxu0 %v763
        %1012 = vmatmul.mubr.f32.gmra.mrb[0].mxu0 %v762
        %v1013 = vpop.f32.mrb[0].mxu0
        %v1014 = vadd.f32 0.0, %v1013
        %v1015 = vpop.f32.mrb[0].mxu0
        %1016 = vmatprep.mubr.f32.mxu0 %v765
        %1017 = vmatmul.mubr.f32.gmra.mrb[0].mxu0 %v764
        %v1018 = vpop.f32.mrb[0].mxu0
        %v1019 = vadd.f32 0.0, %v1018
        %v1020 = vpop.f32.mrb[0].mxu0
        %1021 = vmatprep.mubr.f32.mxu0 %v767
        %1022 = vmatmul.mubr.f32.gmra.mrb[0].mxu0 %v766
        %v1023 = vpop.f32.mrb[0].mxu0
        %v1024 = vadd.f32 0.0, %v1023
        %v1025 = vpop.f32.mrb[0].mxu0
        %1026 = vmatprep.mubr.f32.mxu0 %v769
        %1027 = vmatmul.mubr.f32.gmra.mrb[0].mxu0 %v768
        %v1028 = vpop.f32.mrb[0].mxu0
        %v1029 = vadd.f32 0.0, %v1028
        %v1030 = vpop.f32.mrb[0].mxu0
        %1031 = vmatprep.mubr.f32.mxu0 %v771
        %1032 = vmatmul.mubr.f32.gmra.mrb[0].mxu0 %v770
        %v1033 = vpop.f32.mrb[0].mxu0
        %v1034 = vadd.f32 0.0, %v1033
        %v1035 = vpop.f32.mrb[0].mxu0
        %1036 = vmatprep.mubr.f32.mxu0 %v773
        %1037 = vmatmul.mubr.f32.gmra.mrb[0].mxu0 %v772
        %v1038 = vpop.f32.mrb[0].mxu0
        %v1039 = vadd.f32 0.0, %v1038
        %v1040 = vpop.f32.mrb[0].mxu0
        %1041 = vmatprep.mubr.f32.mxu0 %v775
        %1042 = vmatmul.mubr.f32.gmra.mrb[0].mxu0 %v774
        %v1043 = vpop.f32.mrb[0].mxu0
        %v1044 = vadd.f32 0.0, %v1043
        %v1045 = vpop.f32.mrb[0].mxu0
        %1046 = vmatprep.mubr.f32.mxu0 %v777
        %1047 = vmatmul.mubr.f32.gmra.mrb[0].mxu0 %v776
        %v1048 = vpop.f32.mrb[0].mxu0
        %v1049 = vadd.f32 0.0, %v1048
        %v1050 = vpop.f32.mrb[0].mxu0
        %1051 = vmatprep.mubr.f32.mxu0 %v779
        %1052 = vmatmul.mubr.f32.gmra.mrb[0].mxu0 %v778
        %v1053 = vpop.f32.mrb[0].mxu0
        %v1054 = vadd.f32 0.0, %v1053
        %v1055 = vpop.f32.mrb[0].mxu0
        %1056 = vmatprep.mubr.f32.mxu0 %v781
        %1057 = vmatmul.mubr.f32.gmra.mrb[0].mxu0 %v780
        %v1058 = vpop.f32.mrb[0].mxu0
        %v1059 = vadd.f32 0.0, %v1058
        %v1060 = vpop.f32.mrb[0].mxu0
        %1061 = vmatprep.mubr.f32.mxu0 %v783
        %1062 = vmatmul.mubr.f32.gmra.mrb[0].mxu0 %v782
        %v1063 = vpop.f32.mrb[0].mxu0
        %v1064 = vadd.f32 0.0, %v1063
        %v1065 = vpop.f32.mrb[0].mxu0
        %1066 = vmatprep.mubr.f32.mxu0 %v785
        %1067 = vmatmul.mubr.f32.gmra.mrb[0].mxu0 %v784
        %v1068 = vpop.f32.mrb[0].mxu0
        %v1069 = vadd.f32 0.0, %v1068
        %v1070 = vpop.f32.mrb[0].mxu0
        %1071 = vmatprep.mubr.f32.mxu0 %v787
        %1072 = vmatmul.mubr.f32.gmra.mrb[0].mxu0 %v786
        %v1073 = vpop.f32.mrb[0].mxu0
        %v1074 = vadd.f32 0.0, %v1073
        %v1075 = vpop.f32.mrb[0].mxu0
        %1076 = vdwg.mxu0
        %v1077 = vadd.f32 %v788, %v919
        %v1078 = vadd.f32 %v789, %v924
        %v1079 = vadd.f32 %v790, %v929
        %v1080 = vadd.f32 %v791, %v934
        %v1081 = vadd.f32 %v792, %v939
        %v1082 = vadd.f32 %v793, %v944
        %v1083 = vadd.f32 %v794, %v949
        %v1084 = vadd.f32 %v795, %v954
        %v1085 = vadd.f32 %v796, %v959
        %v1086 = vadd.f32 %v797, %v964
        %v1087 = vadd.f32 %v798, %v969
        %v1088 = vadd.f32 %v799, %v974
        %v1089 = vadd.f32 %v800, %v979
        %v1090 = vadd.f32 %v801, %v984
        %v1091 = vadd.f32 %v802, %v989
        %v1092 = vadd.f32 %v803, %v994
        %v1093 = vadd.f32 %v804, %v999
        %v1094 = vadd.f32 %v805, %v1004
        %v1095 = vadd.f32 %v806, %v1009
        %v1096 = vadd.f32 %v807, %v1014
        %v1097 = vadd.f32 %v808, %v1019
        %v1098 = vadd.f32 %v809, %v1024
        %v1099 = vadd.f32 %v810, %v1029
        %v1100 = vadd.f32 %v811, %v1034
        %v1101 = vadd.f32 %v812, %v1039
        %v1102 = vadd.f32 %v813, %v1044
        %v1103 = vadd.f32 %v814, %v1049
        %v1104 = vadd.f32 %v815, %v1054
        %v1105 = vadd.f32 %v816, %v1059
        %v1106 = vadd.f32 %v817, %v1064
        %v1107 = vadd.f32 %v818, %v1069
        %v1108 = vadd.f32 %v819, %v1074
        %1109 = vst [vmem:[%s345] sm:$0xff] %v1077
        %1110 = vst [vmem:[%s345 + $0x8] sm:$0xff] %v1078
        %1111 = vst [vmem:[%s345 + $0x10] sm:$0xff] %v1079
        %1112 = vst [vmem:[%s345 + $0x18] sm:$0xff] %v1080
        %1113 = vst [vmem:[%s345 + $0x20] sm:$0xff] %v1081
        %1114 = vst [vmem:[%s345 + $0x28] sm:$0xff] %v1082
        %1115 = vst [vmem:[%s345 + $0x30] sm:$0xff] %v1083
        %1116 = vst [vmem:[%s345 + $0x38] sm:$0xff] %v1084
        %1117 = vst [vmem:[%s345 + $0x40] sm:$0xff] %v1085
        %1118 = vst [vmem:[%s345 + $0x48] sm:$0xff] %v1086
        %1119 = vst [vmem:[%s345 + $0x50] sm:$0xff] %v1087
        %1120 = vst [vmem:[%s345 + $0x58] sm:$0xff] %v1088
        %1121 = vst [vmem:[%s345 + $0x60] sm:$0xff] %v1089
        %1122 = vst [vmem:[%s345 + $0x68] sm:$0xff] %v1090
        %1123 = vst [vmem:[%s345 + $0x70] sm:$0xff] %v1091
        %1124 = vst [vmem:[%s345 + $0x78] sm:$0xff] %v1092
        %1125 = vst [vmem:[%s345 + $0x80] sm:$0xff] %v1093
        %1126 = vst [vmem:[%s345 + $0x88] sm:$0xff] %v1094
        %1127 = vst [vmem:[%s345 + $0x90] sm:$0xff] %v1095
        %1128 = vst [vmem:[%s345 + $0x98] sm:$0xff] %v1096
        %1129 = vst [vmem:[%s345 + $0xa0] sm:$0xff] %v1097
        %1130 = vst [vmem:[%s345 + $0xa8] sm:$0xff] %v1098
        %1131 = vst [vmem:[%s345 + $0xb0] sm:$0xff] %v1099
        %1132 = vst [vmem:[%s345 + $0xb8] sm:$0xff] %v1100
        %1133 = vst [vmem:[%s345 + $0xc0] sm:$0xff] %v1101
        %1134 = vst [vmem:[%s345 + $0xc8] sm:$0xff] %v1102
        %1135 = vst [vmem:[%s345 + $0xd0] sm:$0xff] %v1103
        %1136 = vst [vmem:[%s345 + $0xd8] sm:$0xff] %v1104
        %1137 = vst [vmem:[%s345 + $0xe0] sm:$0xff] %v1105
        %1138 = vst [vmem:[%s345 + $0xe8] sm:$0xff] %v1106
        %1139 = vst [vmem:[%s345 + $0xf0] sm:$0xff] %v1107
        %1140 = vst [vmem:[%s345 + $0xf8] sm:$0xff] %v1108
        %p1141 = scmp.eq.s32.totalorder %s30, 1
        // Predicated region
        $region57: #{tpu_custom_call.1} parent=39 // pred_check
          %p1142 = pneg %p1141
        $region58: #{tpu_custom_call.1} parent=39 // pred_check_branch
          %1144 = sbr.rel (%p1142) target = $region60
        $region59: #{tpu_custom_call.1} parent=39 // pred_region
          %v1145 = vld [vmem:[%s345] sm:$0xff]
          %v1146 = vld [vmem:[%s345 + $0x8] sm:$0xff]
          %v1147 = vld [vmem:[%s345 + $0x10] sm:$0xff]
          %v1148 = vld [vmem:[%s345 + $0x18] sm:$0xff]
          %v1149 = vld [vmem:[%s345 + $0x20] sm:$0xff]
          %v1150 = vld [vmem:[%s345 + $0x28] sm:$0xff]
          %v1151 = vld [vmem:[%s345 + $0x30] sm:$0xff]
          %v1152 = vld [vmem:[%s345 + $0x38] sm:$0xff]
          %v1153 = vld [vmem:[%s345 + $0x40] sm:$0xff]
          %v1154 = vld [vmem:[%s345 + $0x48] sm:$0xff]
          %v1155 = vld [vmem:[%s345 + $0x50] sm:$0xff]
          %v1156 = vld [vmem:[%s345 + $0x58] sm:$0xff]
          %v1157 = vld [vmem:[%s345 + $0x60] sm:$0xff]
          %v1158 = vld [vmem:[%s345 + $0x68] sm:$0xff]
          %v1159 = vld [vmem:[%s345 + $0x70] sm:$0xff]
          %v1160 = vld [vmem:[%s345 + $0x78] sm:$0xff]
          %v1161 = vld [vmem:[%s345 + $0x80] sm:$0xff]
          %v1162 = vld [vmem:[%s345 + $0x88] sm:$0xff]
          %v1163 = vld [vmem:[%s345 + $0x90] sm:$0xff]
          %v1164 = vld [vmem:[%s345 + $0x98] sm:$0xff]
          %v1165 = vld [vmem:[%s345 + $0xa0] sm:$0xff]
          %v1166 = vld [vmem:[%s345 + $0xa8] sm:$0xff]
          %v1167 = vld [vmem:[%s345 + $0xb0] sm:$0xff]
          %v1168 = vld [vmem:[%s345 + $0xb8] sm:$0xff]
          %v1169 = vld [vmem:[%s345 + $0xc0] sm:$0xff]
          %v1170 = vld [vmem:[%s345 + $0xc8] sm:$0xff]
          %v1171 = vld [vmem:[%s345 + $0xd0] sm:$0xff]
          %v1172 = vld [vmem:[%s345 + $0xd8] sm:$0xff]
          %v1173 = vld [vmem:[%s345 + $0xe0] sm:$0xff]
          %v1174 = vld [vmem:[%s345 + $0xe8] sm:$0xff]
          %v1175 = vld [vmem:[%s345 + $0xf0] sm:$0xff]
          %v1176 = vld [vmem:[%s345 + $0xf8] sm:$0xff]
          %v1177 = vld [vmem:[%s4] sm:$0x1]
          %v1179 = vlaneseq
          %v1180 = vshrl.u32 %v1179, 7
          %v1181 = vsub.s32 0, %v1180
          %v1182 = vrot.slane %v1177, %v1181
          %v1184 = vadd.f32 %v1145, %v1182
          %v1185 = vadd.f32 %v1146, %v1182
          %v1186 = vadd.f32 %v1147, %v1182
          %v1187 = vadd.f32 %v1148, %v1182
          %v1188 = vadd.f32 %v1149, %v1182
          %v1189 = vadd.f32 %v1150, %v1182
          %v1190 = vadd.f32 %v1151, %v1182
          %v1191 = vadd.f32 %v1152, %v1182
          %v1192 = vadd.f32 %v1153, %v1182
          %v1193 = vadd.f32 %v1154, %v1182
          %v1194 = vadd.f32 %v1155, %v1182
          %v1195 = vadd.f32 %v1156, %v1182
          %v1196 = vadd.f32 %v1157, %v1182
          %v1197 = vadd.f32 %v1158, %v1182
          %v1198 = vadd.f32 %v1159, %v1182
          %v1199 = vadd.f32 %v1160, %v1182
          %v1200 = vadd.f32 %v1161, %v1182
          %v1201 = vadd.f32 %v1162, %v1182
          %v1202 = vadd.f32 %v1163, %v1182
          %v1203 = vadd.f32 %v1164, %v1182
          %v1204 = vadd.f32 %v1165, %v1182
          %v1205 = vadd.f32 %v1166, %v1182
          %v1206 = vadd.f32 %v1167, %v1182
          %v1207 = vadd.f32 %v1168, %v1182
          %v1208 = vadd.f32 %v1169, %v1182
          %v1209 = vadd.f32 %v1170, %v1182
          %v1210 = vadd.f32 %v1171, %v1182
          %v1211 = vadd.f32 %v1172, %v1182
          %v1212 = vadd.f32 %v1173, %v1182
          %v1213 = vadd.f32 %v1174, %v1182
          %v1214 = vadd.f32 %v1175, %v1182
          %v1215 = vadd.f32 %v1176, %v1182
          %1216 = vst [vmem:[%s345] sm:$0xff] %v1184
          %1217 = vst [vmem:[%s345 + $0x8] sm:$0xff] %v1185
          %1218 = vst [vmem:[%s345 + $0x10] sm:$0xff] %v1186
          %1219 = vst [vmem:[%s345 + $0x18] sm:$0xff] %v1187
          %1220 = vst [vmem:[%s345 + $0x20] sm:$0xff] %v1188
          %1221 = vst [vmem:[%s345 + $0x28] sm:$0xff] %v1189
          %1222 = vst [vmem:[%s345 + $0x30] sm:$0xff] %v1190
          %1223 = vst [vmem:[%s345 + $0x38] sm:$0xff] %v1191
          %1224 = vst [vmem:[%s345 + $0x40] sm:$0xff] %v1192
          %1225 = vst [vmem:[%s345 + $0x48] sm:$0xff] %v1193
          %1226 = vst [vmem:[%s345 + $0x50] sm:$0xff] %v1194
          %1227 = vst [vmem:[%s345 + $0x58] sm:$0xff] %v1195
          %1228 = vst [vmem:[%s345 + $0x60] sm:$0xff] %v1196
          %1229 = vst [vmem:[%s345 + $0x68] sm:$0xff] %v1197
          %1230 = vst [vmem:[%s345 + $0x70] sm:$0xff] %v1198
          %1231 = vst [vmem:[%s345 + $0x78] sm:$0xff] %v1199
          %1232 = vst [vmem:[%s345 + $0x80] sm:$0xff] %v1200
          %1233 = vst [vmem:[%s345 + $0x88] sm:$0xff] %v1201
          %1234 = vst [vmem:[%s345 + $0x90] sm:$0xff] %v1202
          %1235 = vst [vmem:[%s345 + $0x98] sm:$0xff] %v1203
          %1236 = vst [vmem:[%s345 + $0xa0] sm:$0xff] %v1204
          %1237 = vst [vmem:[%s345 + $0xa8] sm:$0xff] %v1205
          %1238 = vst [vmem:[%s345 + $0xb0] sm:$0xff] %v1206
          %1239 = vst [vmem:[%s345 + $0xb8] sm:$0xff] %v1207
          %1240 = vst [vmem:[%s345 + $0xc0] sm:$0xff] %v1208
          %1241 = vst [vmem:[%s345 + $0xc8] sm:$0xff] %v1209
          %1242 = vst [vmem:[%s345 + $0xd0] sm:$0xff] %v1210
          %1243 = vst [vmem:[%s345 + $0xd8] sm:$0xff] %v1211
          %1244 = vst [vmem:[%s345 + $0xe0] sm:$0xff] %v1212
          %1245 = vst [vmem:[%s345 + $0xe8] sm:$0xff] %v1213
          %1246 = vst [vmem:[%s345 + $0xf0] sm:$0xff] %v1214
          %1247 = vst [vmem:[%s345 + $0xf8] sm:$0xff] %v1215
        $region60: #{tpu_custom_call.1} parent=39 // pred_fallthru
          _
        %s1248 = sand.u32 %s170, 1
        %s1249 = scalar_lea.sflag [#allocation4], %s1248
        %s1250 = sand.u32 %s170, 1
        %s1251 = smul.addr %s1250, 256
        %s1252 = scalar_lea.vmem [#allocation8], %s1251
        // Predicated region
        $region61: #{tpu_custom_call.1} parent=39 // pred_check
          %p1253 = pneg %p180
        $region62: #{tpu_custom_call.1} parent=39 // pred_check_branch
          %1255 = sbr.rel (%p1253) target = $region64
        $region63: #{tpu_custom_call.1} parent=39 // pred_region
          %s1256 = smul.u32 32, %s29
          %s1258 = ssub.s32 4096, 4096
          %1259 = vsyncadd %s1249, %s1258
          %s1260 = smul.addr %s1256, 128
          %s1261 = scalar_lea.hbm %s5, %s1260
          %s1262 = sshll.u32 %s1252, 4
          %s1263 = int_to_ptr.vmem [resolvable:$true] %s1262
          %1268 = dma.vmem_to_hbm [thread:$0]  %s1263, 4096, %s1261, %s1249, 128, 128, 8
        $region64: #{tpu_custom_call.1} parent=39 // pred_fallthru
          _
      $region40: #{tpu_custom_call.1} parent=5 // pred_fallthru
        _
      %p1269 = scmp.le.s32.totalorder 2, %s20
      // Predicated region
      $region65: #{tpu_custom_call.1} parent=5 // pred_check
        %p1270 = pneg %p1269
      $region66: #{tpu_custom_call.1} parent=5 // pred_check_branch
        %1272 = sbr.rel (%p1270) target = $region68
      $region67: #{tpu_custom_call.1} parent=5 // pred_region
        %s1273 = ssub.s32 %s20, 2
        // Predicated region
        $region69: #{tpu_custom_call.1} parent=67 // pred_check
          %p1274 = pneg %p186
        $region70: #{tpu_custom_call.1} parent=67 // pred_check_branch
          %1276 = sbr.rel (%p1274) target = $region72
        $region71: #{tpu_custom_call.1} parent=67 // pred_region
          %s1277 = sand.u32 %s171, 1
          %s1278 = scalar_lea.sflag [#allocation4], %s1277
          %s1279 = sand.u32 %s171, 1
          %s1280 = smul.addr %s1279, 256
          %s1281 = scalar_lea.vmem [#allocation8], %s1280
          %1282 = dma.done %s1278, 4096
        $region72: #{tpu_custom_call.1} parent=67 // pred_fallthru
          _
      $region68: #{tpu_custom_call.1} parent=5 // pred_fallthru
        _
    $region6: #{tpu_custom_call.1} parent=1 // loop_footer
      %s24 = sadd.s32 1, %s20
    $region7: #{tpu_custom_call.1} parent=1 // loop_footer_branch
      %19 = sbr.rel target = $region3
    $region8: #{tpu_custom_call.1} parent=1 // loop_exit
      _
    %1283 = vsyncpa [#allocation3], 1
    %s1284 = scalar_lea.sflag [#allocation3], 1
    %1285 = vsyncpa %s1284, 1
    %1286 = vsyncpa [#allocation6], 1
    %s1287 = scalar_lea.sflag [#allocation6], 1
    %1288 = vsyncpa %s1287, 1
    %1289 = vsyncpa [#allocation4], 1
    %s1290 = scalar_lea.sflag [#allocation4], 1
    %1291 = vsyncpa %s1290, 1

</llo_original>
